<compile_context>
chip_gen: v7x
topology: tpu7x:2x2x1
jax: 0.10.0
libtpu: 0.0.40
codegen_flags: <defaults>
</compile_context>

<pallas_src>
import math

import jax
import jax.numpy as jnp
from jax import lax
from jax.experimental import pallas as pl
from jax.experimental.pallas import tpu as pltpu


def _softplus(x):
    # matches torch.nn.functional.softplus (beta=1, threshold=20)
    return jnp.where(x > 20.0, x, jnp.log1p(jnp.exp(jnp.minimum(x, 20.0))))


def _silu_ref(x):
    return x * (1.0 / (1.0 + jnp.exp(-x)))


def _silu_k(x):
    # sigmoid via EUP exp + approx reciprocal (EUP slot) instead of a VPU divide
    return x * pl.reciprocal(1.0 + jnp.exp(-x), approx=True)


# ----------------------------- Pallas kernel -------------------------------


def _fused_mamba_kernel(x_ref, w_in_ref, conv_w_ref, conv_b_ref, w_proj_ref,
                        dtp_b_ref, a_t_ref, dskip_ref, w_out_ref,
                        w_last_ref, fcb_ref,
                        o_ref,
                        act_ref, u_ref, proj_ref, y_ref, da_ref, dbu_ref):
    """grid = (batch_block, layer); layers run sequentially per batch block.

    NOTE: o_ref's block index is constant along the layer axis and is written
    only under pl.when(last layer); the layer axis must stay "arbitrary"
    (sequential) for this accumulator-style pattern to be correct.
    """
    layer = pl.program_id(1)
    n_layers = pl.num_programs(1)
    Bb, L, d_model = x_ref.shape
    d_conv, d_inner = conv_w_ref.shape[1], conv_w_ref.shape[2]
    d_state = a_t_ref.shape[1]
    t_chunk = da_ref.shape[0]
    n_chunks = L // t_chunk
    BL = Bb * L

    # Layer 0: load this batch block's activations into the resident slab.
    @pl.when(layer == 0)
    def _():
        act_ref[...] = x_ref[...].reshape(BL, d_model)

    x = act_ref[...]                                           # (BL, d_model) f32

    # ---- fused in_proj: x @ [Wx | Wz] -> (BL, 2*d_inner), static split.
    w_in = w_in_ref[0]
    xz = jnp.dot(x.astype(w_in.dtype), w_in, preferred_element_type=jnp.float32)
    xc = xz[:, :d_inner]
    z = xz[:, d_inner:]

    # ---- causal depthwise conv1d: ONE zero-prefixed pad per batch element +
    # d_conv static tap slices (no per-tap concatenate), then SiLU.
    conv_w = conv_w_ref[0]                                     # (d_conv, d_inner)
    xpad = jnp.concatenate(
        [jnp.zeros((Bb, d_conv - 1, d_inner), jnp.float32),
         xc.reshape(Bb, L, d_inner)], axis=1)                  # (Bb, L+dc-1, d_i)
    u3 = jnp.zeros((Bb, L, d_inner), jnp.float32)
    for k in range(d_conv):
        u3 = u3 + conv_w[k][None, None, :] * xpad[:, k:k + L, :]
    u = _silu_k(u3.reshape(BL, d_inner) + conv_b_ref[0])       # (BL, d_inner)
    u_ref[...] = u

    # ---- fused x_proj: u @ [W_dt.W_dtproj | W_B | W_C | 0-pad]; dt_proj is
    # folded and the output width lane-padded to a multiple of 128 on the
    # host.  Stored raw; softplus applied per time chunk below.
    w_proj = w_proj_ref[0]
    proj_ref[...] = jnp.dot(u.astype(w_proj.dtype), w_proj,
                            preferred_element_type=jnp.float32)

    a_t = a_t_ref[0]                                           # (d_state, d_inner)
    dtp_b = dtp_b_ref[0]                                       # (1, d_inner)
    inner_unroll = True if t_chunk <= 8 else 8

    # ---- selective scan: per batch element, chunked over time.  No per-step
    # MXU readout: the inner loop only updates h and overwrites dbu_ref[t] in
    # place (h history); the C readout is chunk-batched afterwards.
    def scan_elem(be, carry):
        base = be * L

        def chunk_body(c, h):
            t0 = pl.multiple_of(base + c * t_chunk, t_chunk)
            pr = proj_ref[pl.ds(t0, t_chunk), :]               # (Tc, proj_pad)
            dt = _softplus(pr[:, :d_inner] + dtp_b)            # (Tc, d_inner)
            u_c = u_ref[pl.ds(t0, t_chunk), :]                 # (Tc, d_inner)
            b_c = pr[:, d_inner:d_inner + d_state]             # (Tc, d_state)
            # one batched EUP burst per chunk
            # TODO(synk): on v6e/v7x compute da/dbu in bf16 (bf16 EUP), keep h f32.
            da_ref[...] = jnp.exp(dt[:, None, :] * a_t[None, :, :])
            dbu_ref[...] = b_c[:, :, None] * (dt * u_c)[:, None, :]

            def step(t, h):
                h = da_ref[t] * h + dbu_ref[t]
                dbu_ref[t] = h                                 # in-place h history
                return h

            h = lax.fori_loop(0, t_chunk, step, h, unroll=inner_unroll)

            c_c = pr[:, d_inner + d_state:d_inner + 2 * d_state]   # (Tc, d_state)
            y_ref[pl.ds(t0, t_chunk), :] = jnp.sum(
                c_c[:, :, None] * dbu_ref[...], axis=1)        # (Tc, d_inner)
            return h

        lax.fori_loop(0, n_chunks, chunk_body,
                      jnp.zeros((d_state, d_inner), jnp.float32))
        return carry

    lax.fori_loop(0, Bb, scan_elem, 0)

    # ---- D skip, SiLU gate, out_proj.
    y = (y_ref[...] + u * dskip_ref[0]) * _silu_k(z)           # (BL, d_inner)

    @pl.when(layer < n_layers - 1)
    def _():
        w_out = w_out_ref[0]
        act_ref[...] = jnp.dot(y.astype(w_out.dtype), w_out,
                               preferred_element_type=jnp.float32)

    # Last layer: final nn.Linear pre-folded into w_last (bias fc_b); write the
    # lane-padded output block directly (no dead act_ref store).
    @pl.when(layer == n_layers - 1)
    def _():
        w_last = w_last_ref[...]
        out = jnp.dot(y.astype(w_last.dtype), w_last,
                      preferred_element_type=jnp.float32) + fcb_ref[...]
        o_ref[...] = out.reshape(Bb, L, o_ref.shape[2])


# ------------------------------ host wrapper --------------------------------


def _pick_time_chunk(L, d_state, d_inner, budget_bytes=4 << 20, max_chunk=64):
    """Largest multiple-of-8 divisor of L whose da/dbu chunk scratch fits the
    budget (falls back to the largest plain divisor)."""
    per_step = 2 * d_state * d_inner * 4
    cap = max(1, min(max_chunk, budget_bytes // per_step, L))
    fallback = 1
    for tc in range(cap, 0, -1):
        if L % tc == 0:
            if tc % 8 == 0:
                return tc
            fallback = max(fallback, tc)
    return fallback


def _pick_batch_block(B, L, row_bytes, budget_bytes=16 << 20):
    """Largest divisor of B whose flat (Bb*L)-row VMEM scratch fits the budget."""
    best = 1
    for bb in range(1, B + 1):
        if B % bb == 0 and bb * L * row_bytes <= budget_bytes:
            best = bb
    return best


def mamba_block_forward(x, params):
    B, L, d_model = x.shape
    n_layers = params["w_in"].shape[0]
    d_conv, d_inner = params["conv_w"].shape[1], params["conv_w"].shape[2]
    d_state = params["a_t"].shape[1]
    proj_pad = params["w_proj"].shape[2]
    hidden_pad = params["w_last"].shape[1]
    hidden = params["hidden"]

    t_chunk = _pick_time_chunk(L, d_state, d_inner)
    row_bytes = 4 * (d_model + 3 * d_inner + proj_pad + hidden_pad)
    Bb = _pick_batch_block(B, L, row_bytes)
    BL = Bb * L

    def layer_spec(a):
        nd = a.ndim - 1
        return pl.BlockSpec((1,) + a.shape[1:],
                            lambda b, l, _nd=nd: (l,) + (0,) * _nd)

    def const_spec(a):
        nd = a.ndim
        return pl.BlockSpec(a.shape, lambda b, l, _nd=nd: (0,) * _nd)

    layer_keys = ("w_in", "conv_w", "conv_b", "w_proj", "dtp_b", "a_t",
                  "dskip", "w_out")
    # TODO(synk): for very large d_model/d_inner (v7x 64 MiB VMEM), stream
    # w_in/w_proj/w_out from memory_space=pl.ANY with emit_pipeline K/N tiling.
    in_specs = ([pl.BlockSpec((Bb, L, d_model), lambda b, l: (b, 0, 0))]
                + [layer_spec(params[k]) for k in layer_keys]
                + [const_spec(params["w_last"]), const_spec(params["fc_b"])])

    scratch_shapes = [
        pltpu.VMEM((BL, d_model), jnp.float32),                # resident activation
        pltpu.VMEM((BL, d_inner), jnp.float32),                # u (post conv+SiLU)
        pltpu.VMEM((BL, proj_pad), jnp.float32),               # [dt_raw | B | C | pad]
        pltpu.VMEM((BL, d_inner), jnp.float32),                # scan output y
        pltpu.VMEM((t_chunk, d_state, d_inner), jnp.float32),  # exp(dt*A) chunk
        pltpu.VMEM((t_chunk, d_state, d_inner), jnp.float32),  # dB*u -> h history
    ]

    # rough VMEM budget (double-buffered blocks + scratch), generous headroom.
    scratch_bytes = 4 * (BL * (d_model + 2 * d_inner + proj_pad)
                         + 2 * t_chunk * d_state * d_inner)
    block_bytes = 2 * 4 * BL * d_model + 2 * 4 * BL * hidden_pad
    for k in layer_keys:
        a = params[k]
        block_bytes += 2 * a.dtype.itemsize * (int(a.size) // n_layers)
    block_bytes += 2 * params["w_last"].dtype.itemsize * int(params["w_last"].size)
    block_bytes += 2 * 4 * int(params["fc_b"].size)
    # 64 MiB cap keeps v7x safe; on v5e/v6e (128 MiB physical) this can be raised.
    vmem_limit = int(min(64 * 2 ** 20,
                         max(32 * 2 ** 20, 2 * (block_bytes + scratch_bytes))))

    y = pl.pallas_call(
        _fused_mamba_kernel,
        out_shape=jax.ShapeDtypeStruct((B, L, hidden_pad), jnp.float32),
        grid=(B // Bb, n_layers),
        in_specs=in_specs,
        out_specs=pl.BlockSpec((Bb, L, hidden_pad), lambda b, l: (b, 0, 0)),
        scratch_shapes=scratch_shapes,
        compiler_params=pltpu.CompilerParams(
            dimension_semantics=("parallel", "arbitrary"),
            vmem_limit_bytes=vmem_limit),
    )(x, *(params[k] for k in layer_keys), params["w_last"], params["fc_b"])
    return y[:, :, :hidden]


# --------------------------- deterministic params ---------------------------


def init_params(key, input_size, hidden_size, num_layers, d_conv=4, expand=2):
    """Torch-layout parameters for num_layers x Mamba + Linear."""
    d_model = input_size
    d_state = min(2 * input_size, 256)
    d_inner = expand * d_model
    dt_rank = math.ceil(d_model / 16)

    def rn(k, shape, scale):
        return jax.random.normal(k, shape, jnp.float32) * scale

    layers = []
    for _ in range(num_layers):
        key, *ks = jax.random.split(key, 8)
        layers.append(dict(
            in_proj_w=rn(ks[0], (2 * d_inner, d_model), 1.0 / math.sqrt(d_model)),
            conv_w=rn(ks[1], (d_inner, 1, d_conv), 1.0 / math.sqrt(d_conv)),
            conv_b=rn(ks[2], (d_inner,), 0.1),
            x_proj_w=rn(ks[3], (dt_rank + 2 * d_state, d_inner),
                        1.0 / math.sqrt(d_inner)),
            dt_proj_w=rn(ks[4], (d_inner, dt_rank), 1.0),
            dt_proj_b=rn(ks[5], (d_inner,), 0.1),
            out_proj_w=rn(ks[6], (d_model, d_inner), 1.0 / math.sqrt(d_inner)),
            A_log=jnp.log(jnp.tile(
                jnp.arange(1, d_state + 1, dtype=jnp.float32)[None, :],
                (d_inner, 1))),                                   # S4D init
            D=jnp.ones((d_inner,), jnp.float32),
        ))
    key, k1, k2 = jax.random.split(key, 3)
    fc = dict(w=rn(k1, (hidden_size, d_model), 1.0 / math.sqrt(d_model)),
              b=rn(k2, (hidden_size,), 0.1))
    return layers, fc


def pack_params(layers, fc, compute_dtype=jnp.float32, lane_pad=128):
    """Fuse / stack / cast / lane-pad torch-layout params into kernel layout."""
    d_state = layers[0]["A_log"].shape[1]
    dt_rank = layers[0]["dt_proj_w"].shape[1]
    d_inner = layers[0]["A_log"].shape[0]
    proj_w = d_inner + 2 * d_state
    proj_pad = -(-proj_w // lane_pad) * lane_pad

    def stack(fn):
        return jnp.stack([fn(p) for p in layers], axis=0)

    def fuse_xproj(p):
        xp = p["x_proj_w"]                                        # (dt_rank+2S, d_i)
        w_dt = xp[:dt_rank, :].T @ p["dt_proj_w"].T               # dt_proj folded
        w_b = xp[dt_rank:dt_rank + d_state, :].T
        w_c = xp[dt_rank + d_state:, :].T
        w = jnp.concatenate([w_dt, w_b, w_c], axis=1)             # (d_i, d_i+2S)
        return jnp.pad(w, ((0, 0), (0, proj_pad - proj_w)))       # lane-dense

    hidden, d_model = fc["w"].shape
    hidden_pad = -(-hidden // lane_pad) * lane_pad
    # Fold the final nn.Linear into the LAST layer's out_proj (exact, f32 host):
    w_last = layers[-1]["out_proj_w"].T @ fc["w"].T               # (d_inner, hidden)
    w_last = jnp.pad(w_last, ((0, 0), (0, hidden_pad - hidden)))
    fc_b = jnp.zeros((1, hidden_pad), jnp.float32).at[:, :hidden].set(fc["b"][None, :])

    return dict(
        w_in=stack(lambda p: p["in_proj_w"].T).astype(compute_dtype),
        conv_w=stack(lambda p: p["conv_w"][:, 0, :].T),
        conv_b=stack(lambda p: p["conv_b"][None, :]),
        w_proj=stack(fuse_xproj).astype(compute_dtype),
        dtp_b=stack(lambda p: p["dt_proj_b"][None, :]),
        a_t=stack(lambda p: (-jnp.exp(p["A_log"])).T),
        dskip=stack(lambda p: p["D"][None, :]),
        w_out=stack(lambda p: p["out_proj_w"].T).astype(compute_dtype),
        w_last=w_last.astype(compute_dtype),
        fc_b=fc_b,
        hidden=hidden,
    )


# ------------------------------ pure-JAX reference --------------------------


def _mamba_layer_ref(x, p):
    L = x.shape[0]
    d_inner, _, d_conv = p["conv_w"].shape
    dt_rank = p["dt_proj_w"].shape[1]
    d_state = p["A_log"].shape[1]

    xz = x @ p["in_proj_w"].T
    xc, z = xz[:, :d_inner], xz[:, d_inner:]
    w = p["conv_w"][:, 0, :]
    xp = jnp.pad(xc, ((d_conv - 1, 0), (0, 0)))
    u = p["conv_b"][None, :]
    for k in range(d_conv):
        u = u + w[:, k][None, :] * xp[k:k + L, :]
    u = _silu_ref(u)

    xdbl = u @ p["x_proj_w"].T
    dt = _softplus(xdbl[:, :dt_rank] @ p["dt_proj_w"].T + p["dt_proj_b"][None, :])
    Bm = xdbl[:, dt_rank:dt_rank + d_state]
    Cm = xdbl[:, dt_rank + d_state:]
    a_t = (-jnp.exp(p["A_log"])).T

    def step(h, inp):
        dt_t, b_t, c_t, u_t = inp
        h = jnp.exp(a_t * dt_t[None, :]) * h + b_t[:, None] * (dt_t * u_t)[None, :]
        return h, c_t @ h

    _, ys = lax.scan(step, jnp.zeros_like(a_t), (dt, Bm, Cm, u))
    y = (ys + u * p["D"][None, :]) * _silu_ref(z)
    return y @ p["out_proj_w"].T


def mamba_block_ref(x, layers, fc):
    y = x
    for p in layers:
        y = jax.vmap(lambda xb, _p=p: _mamba_layer_ref(xb, _p))(y)
    return y @ fc["w"].T + fc["b"][None, None, :]


# ----------------------------------- main ------------------------------------

if __name__ == "__main__":
    B, L = 2, 8
    input_size, hidden_size, num_layers = 16, 32, 2   # d_state=32, d_inner=32, dt_rank=1

    key = jax.random.PRNGKey(0)
    kx, kp = jax.random.split(key)
    x = jax.random.normal(kx, (B, L, input_size), jnp.float32)
    layers, fc = init_params(kp, input_size, hidden_size, num_layers)

    y_ref = jax.block_until_ready(mamba_block_ref(x, layers, fc))

    # f32 matmul operands: tight check against the pure-JAX reference.
    y32 = jax.block_until_ready(
        mamba_block_forward(x, pack_params(layers, fc, jnp.float32)))
    assert y32.shape == (B, L, hidden_size), y32.shape
    assert jnp.allclose(y32, y_ref, rtol=1e-2, atol=1e-2), \
        float(jnp.max(jnp.abs(y32 - y_ref)))

    # bf16 matmul operands (f32 accumulation, f32 scan state): smoke check.
    y16 = jax.block_until_ready(
        mamba_block_forward(x, pack_params(layers, fc, jnp.bfloat16)))
    assert y16.shape == (B, L, hidden_size), y16.shape
    assert float(jnp.max(jnp.abs(y16 - y_ref))) < 0.5

    print("KERNEL_OK")
</pallas_src>

<mosaic_0001>
module attributes {stable_mosaic.version = 11 : i64} {
  func.func @_fused_mamba_kernel(%arg0: i32, %arg1: i32, %arg2: memref<2x8x16xf32, #tpu.memory_space<vmem>>, %arg3: memref<1x16x64xf32, #tpu.memory_space<vmem>>, %arg4: memref<1x4x32xf32, #tpu.memory_space<vmem>>, %arg5: memref<1x1x32xf32, #tpu.memory_space<vmem>>, %arg6: memref<1x32x128xf32, #tpu.memory_space<vmem>>, %arg7: memref<1x1x32xf32, #tpu.memory_space<vmem>>, %arg8: memref<1x32x32xf32, #tpu.memory_space<vmem>>, %arg9: memref<1x1x32xf32, #tpu.memory_space<vmem>>, %arg10: memref<1x32x16xf32, #tpu.memory_space<vmem>>, %arg11: memref<32x128xf32, #tpu.memory_space<vmem>>, %arg12: memref<1x128xf32, #tpu.memory_space<vmem>>, %arg13: memref<2x8x128xf32, #tpu.memory_space<vmem>>, %arg14: memref<16x16xf32, #tpu.memory_space<vmem>>, %arg15: memref<16x32xf32, #tpu.memory_space<vmem>>, %arg16: memref<16x128xf32, #tpu.memory_space<vmem>>, %arg17: memref<16x32xf32, #tpu.memory_space<vmem>>, %arg18: memref<8x32x32xf32, #tpu.memory_space<vmem>>, %arg19: memref<8x32x32xf32, #tpu.memory_space<vmem>>) attributes {dimension_semantics = [#tpu.dimension_semantics<parallel>, #tpu.dimension_semantics<arbitrary>], iteration_bounds = array<i64: 1, 2>, scalar_prefetch = 0 : i64, scratch_operands = 6 : i64, tpu.core_type = #tpu.core_type<tc>, window_params = [{transform_indices = @transform_0, window_bounds = array<i64: 2, 8, 16>}, {transform_indices = @transform_1, window_bounds = array<i64: 1, 16, 64>}, {transform_indices = @transform_2, window_bounds = array<i64: 1, 4, 32>}, {transform_indices = @transform_3, window_bounds = array<i64: 1, 1, 32>}, {transform_indices = @transform_4, window_bounds = array<i64: 1, 32, 128>}, {transform_indices = @transform_5, window_bounds = array<i64: 1, 1, 32>}, {transform_indices = @transform_6, window_bounds = array<i64: 1, 32, 32>}, {transform_indices = @transform_7, window_bounds = array<i64: 1, 1, 32>}, {transform_indices = @transform_8, window_bounds = array<i64: 1, 32, 16>}, {pipeline_mode = #tpu.pipeline_mode<synchronous>, transform_indices = @transform_9, window_bounds = array<i64: 32, 128>}, {pipeline_mode = #tpu.pipeline_mode<synchronous>, transform_indices = @transform_10, window_bounds = array<i64: 1, 128>}, {transform_indices = @transform_11, window_bounds = array<i64: 2, 8, 128>}]} {
    %c0_i32 = arith.constant 0 : i32
    %0 = arith.cmpi eq, %arg1, %c0_i32 : i32
    %1 = arith.extui %0 : i1 to i32
    %c0_i32_0 = arith.constant 0 : i32
    %2 = arith.cmpi ne, %1, %c0_i32_0 : i32
    scf.if %2 {
      %c0_42 = arith.constant 0 : index
      %c0_43 = arith.constant 0 : index
      %c0_44 = arith.constant 0 : index
      %85 = vector.load %arg2[%c0_42, %c0_43, %c0_44] : memref<2x8x16xf32, #tpu.memory_space<vmem>>, vector<2x8x16xf32>
      %86 = vector.shape_cast %85 : vector<2x8x16xf32> to vector<16x16xf32>
      %c0_45 = arith.constant 0 : index
      %c0_46 = arith.constant 0 : index
      %87 = vector.load %arg14[%c0_45, %c0_46] : memref<16x16xf32, #tpu.memory_space<vmem>>, vector<16x16xf32>
      tpu.vector_store %arg14[%c0_45, %c0_46], %86 {strides = array<i32>} : memref<16x16xf32, #tpu.memory_space<vmem>>, vector<16x16xf32>,
    } else {
    }
    %c0 = arith.constant 0 : index
    %c0_1 = arith.constant 0 : index
    %3 = vector.load %arg14[%c0, %c0_1] : memref<16x16xf32, #tpu.memory_space<vmem>>, vector<16x16xf32>
    %c0_2 = arith.constant 0 : index
    %c0_3 = arith.constant 0 : index
    %c0_4 = arith.constant 0 : index
    %4 = vector.load %arg3[%c0_2, %c0_3, %c0_4] : memref<1x16x64xf32, #tpu.memory_space<vmem>>, vector<1x16x64xf32>
    %5 = vector.shape_cast %4 : vector<1x16x64xf32> to vector<16x64xf32>
    %cst = arith.constant dense<0.000000e+00> : vector<16x64xf32>
    %6 = tpu.matmul %3, %5, %cst {dimension_numbers = #tpu.dot_dimension_numbers<[1], [0], [0], [1], [0, 0, 1, 1], [], []>} : vector<16x16xf32>, vector<16x64xf32>, vector<16x64xf32> -> vector<16x64xf32>
    %7 = vector.extract_strided_slice %6 {offsets = [0, 0], sizes = [16, 32], strides = [1, 1]} : vector<16x64xf32> to vector<16x32xf32>
    %8 = vector.extract_strided_slice %6 {offsets = [0, 32], sizes = [16, 32], strides = [1, 1]} : vector<16x64xf32> to vector<16x32xf32>
    %c0_5 = arith.constant 0 : index
    %c0_6 = arith.constant 0 : index
    %c0_7 = arith.constant 0 : index
    %9 = vector.load %arg4[%c0_5, %c0_6, %c0_7] : memref<1x4x32xf32, #tpu.memory_space<vmem>>, vector<1x4x32xf32>
    %10 = vector.shape_cast %9 : vector<1x4x32xf32> to vector<4x32xf32>
    %cst_8 = arith.constant 0.000000e+00 : f32
    %11 = vector.broadcast %cst_8 : f32 to vector<2x3x32xf32>
    %12 = vector.shape_cast %7 : vector<16x32xf32> to vector<2x8x32xf32>
    %13 = tpu.concatenate %11, %12 in 1 : vector<2x3x32xf32>, vector<2x8x32xf32> -> vector<2x11x32xf32>
    %cst_9 = arith.constant 0.000000e+00 : f32
    %14 = vector.broadcast %cst_9 : f32 to vector<2x8x32xf32>
    %15 = vector.extract_strided_slice %10 {offsets = [0, 0], sizes = [1, 32], strides = [1, 1]} : vector<4x32xf32> to vector<1x32xf32>
    %16 = vector.shape_cast %15 : vector<1x32xf32> to vector<32xf32>
    %17 = vector.shape_cast %16 : vector<32xf32> to vector<1x1x32xf32>
    %18 = vector.extract_strided_slice %13 {offsets = [0, 0, 0], sizes = [2, 8, 32], strides = [1, 1, 1]} : vector<2x11x32xf32> to vector<2x8x32xf32>
    %19 = vector.broadcast %17 : vector<1x1x32xf32> to vector<2x8x32xf32>
    %20 = arith.mulf %19, %18 : vector<2x8x32xf32>
    %21 = arith.addf %14, %20 : vector<2x8x32xf32>
    %22 = vector.extract_strided_slice %10 {offsets = [1, 0], sizes = [1, 32], strides = [1, 1]} : vector<4x32xf32> to vector<1x32xf32>
    %23 = vector.shape_cast %22 : vector<1x32xf32> to vector<32xf32>
    %24 = vector.shape_cast %23 : vector<32xf32> to vector<1x1x32xf32>
    %25 = vector.extract_strided_slice %13 {offsets = [0, 1, 0], sizes = [2, 8, 32], strides = [1, 1, 1]} : vector<2x11x32xf32> to vector<2x8x32xf32>
    %26 = vector.broadcast %24 : vector<1x1x32xf32> to vector<2x8x32xf32>
    %27 = arith.mulf %26, %25 : vector<2x8x32xf32>
    %28 = arith.addf %21, %27 : vector<2x8x32xf32>
    %29 = vector.extract_strided_slice %10 {offsets = [2, 0], sizes = [1, 32], strides = [1, 1]} : vector<4x32xf32> to vector<1x32xf32>
    %30 = vector.shape_cast %29 : vector<1x32xf32> to vector<32xf32>
    %31 = vector.shape_cast %30 : vector<32xf32> to vector<1x1x32xf32>
    %32 = vector.extract_strided_slice %13 {offsets = [0, 2, 0], sizes = [2, 8, 32], strides = [1, 1, 1]} : vector<2x11x32xf32> to vector<2x8x32xf32>
    %33 = vector.broadcast %31 : vector<1x1x32xf32> to vector<2x8x32xf32>
    %34 = arith.mulf %33, %32 : vector<2x8x32xf32>
    %35 = arith.addf %28, %34 : vector<2x8x32xf32>
    %36 = vector.extract_strided_slice %10 {offsets = [3, 0], sizes = [1, 32], strides = [1, 1]} : vector<4x32xf32> to vector<1x32xf32>
    %37 = vector.shape_cast %36 : vector<1x32xf32> to vector<32xf32>
    %38 = vector.shape_cast %37 : vector<32xf32> to vector<1x1x32xf32>
    %39 = vector.extract_strided_slice %13 {offsets = [0, 3, 0], sizes = [2, 8, 32], strides = [1, 1, 1]} : vector<2x11x32xf32> to vector<2x8x32xf32>
    %40 = vector.broadcast %38 : vector<1x1x32xf32> to vector<2x8x32xf32>
    %41 = arith.mulf %40, %39 : vector<2x8x32xf32>
    %42 = arith.addf %35, %41 : vector<2x8x32xf32>
    %43 = vector.shape_cast %42 : vector<2x8x32xf32> to vector<16x32xf32>
    %c0_10 = arith.constant 0 : index
    %c0_11 = arith.constant 0 : index
    %c0_12 = arith.constant 0 : index
    %44 = vector.load %arg5[%c0_10, %c0_11, %c0_12] : memref<1x1x32xf32, #tpu.memory_space<vmem>>, vector<1x1x32xf32>
    %45 = vector.shape_cast %44 : vector<1x1x32xf32> to vector<1x32xf32>
    %46 = vector.broadcast %45 : vector<1x32xf32> to vector<16x32xf32>
    %47 = arith.addf %43, %46 : vector<16x32xf32>
    %cst_13 = arith.constant 0.000000e+00 : f32
    %48 = vector.broadcast %cst_13 : f32 to vector<16x32xf32>
    %49 = arith.subf %48, %47 : vector<16x32xf32>
    %50 = math.exp %49 : vector<16x32xf32>
    %cst_14 = arith.constant 1.000000e+00 : f32
    %51 = vector.broadcast %cst_14 : f32 to vector<16x32xf32>
    %52 = arith.addf %51, %50 : vector<16x32xf32>
    %53 = tpu.reciprocal %52 {approx = true} : vector<16x32xf32> -> vector<16x32xf32>
    %54 = arith.mulf %47, %53 : vector<16x32xf32>
    %c0_15 = arith.constant 0 : index
    %c0_16 = arith.constant 0 : index
    %55 = vector.load %arg15[%c0_15, %c0_16] : memref<16x32xf32, #tpu.memory_space<vmem>>, vector<16x32xf32>
    tpu.vector_store %arg15[%c0_15, %c0_16], %54 {strides = array<i32>} : memref<16x32xf32, #tpu.memory_space<vmem>>, vector<16x32xf32>,
    %c0_17 = arith.constant 0 : index
    %c0_18 = arith.constant 0 : index
    %c0_19 = arith.constant 0 : index
    %56 = vector.load %arg6[%c0_17, %c0_18, %c0_19] : memref<1x32x128xf32, #tpu.memory_space<vmem>>, vector<1x32x128xf32>
    %57 = vector.shape_cast %56 : vector<1x32x128xf32> to vector<32x128xf32>
    %cst_20 = arith.constant dense<0.000000e+00> : vector<16x128xf32>
    %58 = tpu.matmul %54, %57, %cst_20 {dimension_numbers = #tpu.dot_dimension_numbers<[1], [0], [0], [1], [0, 0, 1, 1], [], []>} : vector<16x32xf32>, vector<32x128xf32>, vector<16x128xf32> -> vector<16x128xf32>
    %c0_21 = arith.constant 0 : index
    %c0_22 = arith.constant 0 : index
    %59 = vector.load %arg16[%c0_21, %c0_22] : memref<16x128xf32, #tpu.memory_space<vmem>>, vector<16x128xf32>
    tpu.vector_store %arg16[%c0_21, %c0_22], %58 {strides = array<i32>} : memref<16x128xf32, #tpu.memory_space<vmem>>, vector<16x128xf32>,
    %c0_23 = arith.constant 0 : index
    %c0_24 = arith.constant 0 : index
    %c0_25 = arith.constant 0 : index
    %60 = vector.load %arg8[%c0_23, %c0_24, %c0_25] : memref<1x32x32xf32, #tpu.memory_space<vmem>>, vector<1x32x32xf32>
    %61 = vector.shape_cast %60 : vector<1x32x32xf32> to vector<32x32xf32>
    %c0_26 = arith.constant 0 : index
    %c0_27 = arith.constant 0 : index
    %c0_28 = arith.constant 0 : index
    %62 = vector.load %arg7[%c0_26, %c0_27, %c0_28] : memref<1x1x32xf32, #tpu.memory_space<vmem>>, vector<1x1x32xf32>
    %63 = vector.shape_cast %62 : vector<1x1x32xf32> to vector<1x32xf32>
    %c0_i32_29 = arith.constant 0 : i32
    %c2_i32 = arith.constant 2 : i32
    %64 = arith.addi %c0_i32_29, %c2_i32 : i32
    %c1_i32 = arith.constant 1 : i32
    scf.for %arg20 = %c0_i32_29 to %64 step %c1_i32  : i32 {
      %c8_i32 = arith.constant 8 : i32
      %85 = arith.muli %arg20, %c8_i32 : i32
      %cst_42 = arith.constant 0.000000e+00 : f32
      %86 = vector.broadcast %cst_42 : f32 to vector<32x32xf32>
      %c0_i32_43 = arith.constant 0 : i32
      %c8_i32_44 = arith.constant 8 : i32
      %87 = arith.muli %c0_i32_43, %c8_i32_44 : i32
      %88 = arith.addi %85, %87 : i32
      %89 = tpu.assume_multiple %88, 8 : i32
      %90 = arith.index_cast %89 : i32 to index
      %c0_45 = arith.constant 0 : index
      %91 = vector.load %arg16[%90, %c0_45] : memref<16x128xf32, #tpu.memory_space<vmem>>, vector<8x128xf32>
      %92 = vector.extract_strided_slice %91 {offsets = [0, 0], sizes = [8, 32], strides = [1, 1]} : vector<8x128xf32> to vector<8x32xf32>
      %93 = vector.broadcast %63 : vector<1x32xf32> to vector<8x32xf32>
      %94 = arith.addf %92, %93 : vector<8x32xf32>
      %cst_46 = arith.constant 2.000000e+01 : f32
      %95 = vector.broadcast %cst_46 : f32 to vector<8x32xf32>
      %96 = arith.cmpf ogt, %94, %95 : vector<8x32xf32>
      %cst_47 = arith.constant 2.000000e+01 : f32
      %97 = vector.broadcast %cst_47 : f32 to vector<8x32xf32>
      %98 = arith.minimumf %94, %97 : vector<8x32xf32>
      %99 = math.exp %98 : vector<8x32xf32>
      %100 = math.log1p %99 : vector<8x32xf32>
      %101 = arith.select %96, %94, %100 : vector<8x32xi1>, vector<8x32xf32>
      %102 = arith.index_cast %89 : i32 to index
      %c0_48 = arith.constant 0 : index
      %103 = vector.load %arg15[%102, %c0_48] : memref<16x32xf32, #tpu.memory_space<vmem>>, vector<8x32xf32>
      %104 = vector.extract_strided_slice %91 {offsets = [0, 32], sizes = [8, 32], strides = [1, 1]} : vector<8x128xf32> to vector<8x32xf32>
      %105 = vector.shape_cast %101 : vector<8x32xf32> to vector<8x1x32xf32>
      %106 = vector.shape_cast %61 : vector<32x32xf32> to vector<1x32x32xf32>
      %107 = vector.broadcast %105 : vector<8x1x32xf32> to vector<8x32x32xf32>
      %108 = vector.broadcast %106 : vector<1x32x32xf32> to vector<8x32x32xf32>
      %109 = arith.mulf %107, %108 : vector<8x32x32xf32>
      %110 = math.exp %109 : vector<8x32x32xf32>
      %c0_49 = arith.constant 0 : index
      %c0_50 = arith.constant 0 : index
      %c0_51 = arith.constant 0 : index
      %111 = vector.load %arg18[%c0_49, %c0_50, %c0_51] : memref<8x32x32xf32, #tpu.memory_space<vmem>>, vector<8x32x32xf32>
      tpu.vector_store %arg18[%c0_49, %c0_50, %c0_51], %110 {strides = array<i32>} : memref<8x32x32xf32, #tpu.memory_space<vmem>>, vector<8x32x32xf32>,
      %112 = vector.shape_cast %104 : vector<8x32xf32> to vector<8x32x1xf32>
      %113 = arith.mulf %101, %103 : vector<8x32xf32>
      %114 = vector.shape_cast %113 : vector<8x32xf32> to vector<8x1x32xf32>
      %115 = vector.broadcast %112 : vector<8x32x1xf32> to vector<8x32x32xf32>
      %116 = vector.broadcast %114 : vector<8x1x32xf32> to vector<8x32x32xf32>
      %117 = arith.mulf %115, %116 : vector<8x32x32xf32>
      %c0_52 = arith.constant 0 : index
      %c0_53 = arith.constant 0 : index
      %c0_54 = arith.constant 0 : index
      %118 = vector.load %arg19[%c0_52, %c0_53, %c0_54] : memref<8x32x32xf32, #tpu.memory_space<vmem>>, vector<8x32x32xf32>
      tpu.vector_store %arg19[%c0_52, %c0_53, %c0_54], %117 {strides = array<i32>} : memref<8x32x32xf32, #tpu.memory_space<vmem>>, vector<8x32x32xf32>,
      %c0_i32_55 = arith.constant 0 : i32
      %119 = arith.index_cast %c0_i32_55 : i32 to index
      %c0_56 = arith.constant 0 : index
      %c0_57 = arith.constant 0 : index
      %120 = vector.load %arg18[%119, %c0_56, %c0_57] : memref<8x32x32xf32, #tpu.memory_space<vmem>>, vector<1x32x32xf32>
      %121 = vector.shape_cast %120 : vector<1x32x32xf32> to vector<32x32xf32>
      %122 = arith.mulf %121, %86 : vector<32x32xf32>
      %123 = arith.index_cast %c0_i32_55 : i32 to index
      %c0_58 = arith.constant 0 : index
      %c0_59 = arith.constant 0 : index
      %124 = vector.load %arg19[%123, %c0_58, %c0_59] : memref<8x32x32xf32, #tpu.memory_space<vmem>>, vector<1x32x32xf32>
      %125 = vector.shape_cast %124 : vector<1x32x32xf32> to vector<32x32xf32>
      %126 = arith.addf %122, %125 : vector<32x32xf32>
      %127 = arith.index_cast %c0_i32_55 : i32 to index
      %c0_60 = arith.constant 0 : index
      %c0_61 = arith.constant 0 : index
      %128 = vector.load %arg19[%127, %c0_60, %c0_61] : memref<8x32x32xf32, #tpu.memory_space<vmem>>, vector<1x32x32xf32>
      %129 = vector.shape_cast %128 : vector<1x32x32xf32> to vector<32x32xf32>
      %130 = vector.shape_cast %126 : vector<32x32xf32> to vector<1x32x32xf32>
      tpu.vector_store %arg19[%127, %c0_60, %c0_61], %130 {strides = array<i32>} : memref<8x32x32xf32, #tpu.memory_space<vmem>>, vector<1x32x32xf32>,
      %c1_i32_62 = arith.constant 1 : i32
      %131 = arith.index_cast %c1_i32_62 : i32 to index
      %c0_63 = arith.constant 0 : index
      %c0_64 = arith.constant 0 : index
      %132 = vector.load %arg18[%131, %c0_63, %c0_64] : memref<8x32x32xf32, #tpu.memory_space<vmem>>, vector<1x32x32xf32>
      %133 = vector.shape_cast %132 : vector<1x32x32xf32> to vector<32x32xf32>
      %134 = arith.mulf %133, %126 : vector<32x32xf32>
      %135 = arith.index_cast %c1_i32_62 : i32 to index
      %c0_65 = arith.constant 0 : index
      %c0_66 = arith.constant 0 : index
      %136 = vector.load %arg19[%135, %c0_65, %c0_66] : memref<8x32x32xf32, #tpu.memory_space<vmem>>, vector<1x32x32xf32>
      %137 = vector.shape_cast %136 : vector<1x32x32xf32> to vector<32x32xf32>
      %138 = arith.addf %134, %137 : vector<32x32xf32>
      %139 = arith.index_cast %c1_i32_62 : i32 to index
      %c0_67 = arith.constant 0 : index
      %c0_68 = arith.constant 0 : index
      %140 = vector.load %arg19[%139, %c0_67, %c0_68] : memref<8x32x32xf32, #tpu.memory_space<vmem>>, vector<1x32x32xf32>
      %141 = vector.shape_cast %140 : vector<1x32x32xf32> to vector<32x32xf32>
      %142 = vector.shape_cast %138 : vector<32x32xf32> to vector<1x32x32xf32>
      tpu.vector_store %arg19[%139, %c0_67, %c0_68], %142 {strides = array<i32>} : memref<8x32x32xf32, #tpu.memory_space<vmem>>, vector<1x32x32xf32>,
      %c2_i32_69 = arith.constant 2 : i32
      %143 = arith.index_cast %c2_i32_69 : i32 to index
      %c0_70 = arith.constant 0 : index
      %c0_71 = arith.constant 0 : index
      %144 = vector.load %arg18[%143, %c0_70, %c0_71] : memref<8x32x32xf32, #tpu.memory_space<vmem>>, vector<1x32x32xf32>
      %145 = vector.shape_cast %144 : vector<1x32x32xf32> to vector<32x32xf32>
      %146 = arith.mulf %145, %138 : vector<32x32xf32>
      %147 = arith.index_cast %c2_i32_69 : i32 to index
      %c0_72 = arith.constant 0 : index
      %c0_73 = arith.constant 0 : index
      %148 = vector.load %arg19[%147, %c0_72, %c0_73] : memref<8x32x32xf32, #tpu.memory_space<vmem>>, vector<1x32x32xf32>
      %149 = vector.shape_cast %148 : vector<1x32x32xf32> to vector<32x32xf32>
      %150 = arith.addf %146, %149 : vector<32x32xf32>
      %151 = arith.index_cast %c2_i32_69 : i32 to index
      %c0_74 = arith.constant 0 : index
      %c0_75 = arith.constant 0 : index
      %152 = vector.load %arg19[%151, %c0_74, %c0_75] : memref<8x32x32xf32, #tpu.memory_space<vmem>>, vector<1x32x32xf32>
      %153 = vector.shape_cast %152 : vector<1x32x32xf32> to vector<32x32xf32>
      %154 = vector.shape_cast %150 : vector<32x32xf32> to vector<1x32x32xf32>
      tpu.vector_store %arg19[%151, %c0_74, %c0_75], %154 {strides = array<i32>} : memref<8x32x32xf32, #tpu.memory_space<vmem>>, vector<1x32x32xf32>,
      %c3_i32 = arith.constant 3 : i32
      %155 = arith.index_cast %c3_i32 : i32 to index
      %c0_76 = arith.constant 0 : index
      %c0_77 = arith.constant 0 : index
      %156 = vector.load %arg18[%155, %c0_76, %c0_77] : memref<8x32x32xf32, #tpu.memory_space<vmem>>, vector<1x32x32xf32>
      %157 = vector.shape_cast %156 : vector<1x32x32xf32> to vector<32x32xf32>
      %158 = arith.mulf %157, %150 : vector<32x32xf32>
      %159 = arith.index_cast %c3_i32 : i32 to index
      %c0_78 = arith.constant 0 : index
      %c0_79 = arith.constant 0 : index
      %160 = vector.load %arg19[%159, %c0_78, %c0_79] : memref<8x32x32xf32, #tpu.memory_space<vmem>>, vector<1x32x32xf32>
      %161 = vector.shape_cast %160 : vector<1x32x32xf32> to vector<32x32xf32>
      %162 = arith.addf %158, %161 : vector<32x32xf32>
      %163 = arith.index_cast %c3_i32 : i32 to index
      %c0_80 = arith.constant 0 : index
      %c0_81 = arith.constant 0 : index
      %164 = vector.load %arg19[%163, %c0_80, %c0_81] : memref<8x32x32xf32, #tpu.memory_space<vmem>>, vector<1x32x32xf32>
      %165 = vector.shape_cast %164 : vector<1x32x32xf32> to vector<32x32xf32>
      %166 = vector.shape_cast %162 : vector<32x32xf32> to vector<1x32x32xf32>
      tpu.vector_store %arg19[%163, %c0_80, %c0_81], %166 {strides = array<i32>} : memref<8x32x32xf32, #tpu.memory_space<vmem>>, vector<1x32x32xf32>,
      %c4_i32 = arith.constant 4 : i32
      %167 = arith.index_cast %c4_i32 : i32 to index
      %c0_82 = arith.constant 0 : index
      %c0_83 = arith.constant 0 : index
      %168 = vector.load %arg18[%167, %c0_82, %c0_83] : memref<8x32x32xf32, #tpu.memory_space<vmem>>, vector<1x32x32xf32>
      %169 = vector.shape_cast %168 : vector<1x32x32xf32> to vector<32x32xf32>
      %170 = arith.mulf %169, %162 : vector<32x32xf32>
      %171 = arith.index_cast %c4_i32 : i32 to index
      %c0_84 = arith.constant 0 : index
      %c0_85 = arith.constant 0 : index
      %172 = vector.load %arg19[%171, %c0_84, %c0_85] : memref<8x32x32xf32, #tpu.memory_space<vmem>>, vector<1x32x32xf32>
      %173 = vector.shape_cast %172 : vector<1x32x32xf32> to vector<32x32xf32>
      %174 = arith.addf %170, %173 : vector<32x32xf32>
      %175 = arith.index_cast %c4_i32 : i32 to index
      %c0_86 = arith.constant 0 : index
      %c0_87 = arith.constant 0 : index
      %176 = vector.load %arg19[%175, %c0_86, %c0_87] : memref<8x32x32xf32, #tpu.memory_space<vmem>>, vector<1x32x32xf32>
      %177 = vector.shape_cast %176 : vector<1x32x32xf32> to vector<32x32xf32>
      %178 = vector.shape_cast %174 : vector<32x32xf32> to vector<1x32x32xf32>
      tpu.vector_store %arg19[%175, %c0_86, %c0_87], %178 {strides = array<i32>} : memref<8x32x32xf32, #tpu.memory_space<vmem>>, vector<1x32x32xf32>,
      %c5_i32 = arith.constant 5 : i32
      %179 = arith.index_cast %c5_i32 : i32 to index
      %c0_88 = arith.constant 0 : index
      %c0_89 = arith.constant 0 : index
      %180 = vector.load %arg18[%179, %c0_88, %c0_89] : memref<8x32x32xf32, #tpu.memory_space<vmem>>, vector<1x32x32xf32>
      %181 = vector.shape_cast %180 : vector<1x32x32xf32> to vector<32x32xf32>
      %182 = arith.mulf %181, %174 : vector<32x32xf32>
      %183 = arith.index_cast %c5_i32 : i32 to index
      %c0_90 = arith.constant 0 : index
      %c0_91 = arith.constant 0 : index
      %184 = vector.load %arg19[%183, %c0_90, %c0_91] : memref<8x32x32xf32, #tpu.memory_space<vmem>>, vector<1x32x32xf32>
      %185 = vector.shape_cast %184 : vector<1x32x32xf32> to vector<32x32xf32>
      %186 = arith.addf %182, %185 : vector<32x32xf32>
      %187 = arith.index_cast %c5_i32 : i32 to index
      %c0_92 = arith.constant 0 : index
      %c0_93 = arith.constant 0 : index
      %188 = vector.load %arg19[%187, %c0_92, %c0_93] : memref<8x32x32xf32, #tpu.memory_space<vmem>>, vector<1x32x32xf32>
      %189 = vector.shape_cast %188 : vector<1x32x32xf32> to vector<32x32xf32>
      %190 = vector.shape_cast %186 : vector<32x32xf32> to vector<1x32x32xf32>
      tpu.vector_store %arg19[%187, %c0_92, %c0_93], %190 {strides = array<i32>} : memref<8x32x32xf32, #tpu.memory_space<vmem>>, vector<1x32x32xf32>,
      %c6_i32 = arith.constant 6 : i32
      %191 = arith.index_cast %c6_i32 : i32 to index
      %c0_94 = arith.constant 0 : index
      %c0_95 = arith.constant 0 : index
      %192 = vector.load %arg18[%191, %c0_94, %c0_95] : memref<8x32x32xf32, #tpu.memory_space<vmem>>, vector<1x32x32xf32>
      %193 = vector.shape_cast %192 : vector<1x32x32xf32> to vector<32x32xf32>
      %194 = arith.mulf %193, %186 : vector<32x32xf32>
      %195 = arith.index_cast %c6_i32 : i32 to index
      %c0_96 = arith.constant 0 : index
      %c0_97 = arith.constant 0 : index
      %196 = vector.load %arg19[%195, %c0_96, %c0_97] : memref<8x32x32xf32, #tpu.memory_space<vmem>>, vector<1x32x32xf32>
      %197 = vector.shape_cast %196 : vector<1x32x32xf32> to vector<32x32xf32>
      %198 = arith.addf %194, %197 : vector<32x32xf32>
      %199 = arith.index_cast %c6_i32 : i32 to index
      %c0_98 = arith.constant 0 : index
      %c0_99 = arith.constant 0 : index
      %200 = vector.load %arg19[%199, %c0_98, %c0_99] : memref<8x32x32xf32, #tpu.memory_space<vmem>>, vector<1x32x32xf32>
      %201 = vector.shape_cast %200 : vector<1x32x32xf32> to vector<32x32xf32>
      %202 = vector.shape_cast %198 : vector<32x32xf32> to vector<1x32x32xf32>
      tpu.vector_store %arg19[%199, %c0_98, %c0_99], %202 {strides = array<i32>} : memref<8x32x32xf32, #tpu.memory_space<vmem>>, vector<1x32x32xf32>,
      %c7_i32 = arith.constant 7 : i32
      %203 = arith.index_cast %c7_i32 : i32 to index
      %c0_100 = arith.constant 0 : index
      %c0_101 = arith.constant 0 : index
      %204 = vector.load %arg18[%203, %c0_100, %c0_101] : memref<8x32x32xf32, #tpu.memory_space<vmem>>, vector<1x32x32xf32>
      %205 = vector.shape_cast %204 : vector<1x32x32xf32> to vector<32x32xf32>
      %206 = arith.mulf %205, %198 : vector<32x32xf32>
      %207 = arith.index_cast %c7_i32 : i32 to index
      %c0_102 = arith.constant 0 : index
      %c0_103 = arith.constant 0 : index
      %208 = vector.load %arg19[%207, %c0_102, %c0_103] : memref<8x32x32xf32, #tpu.memory_space<vmem>>, vector<1x32x32xf32>
      %209 = vector.shape_cast %208 : vector<1x32x32xf32> to vector<32x32xf32>
      %210 = arith.addf %206, %209 : vector<32x32xf32>
      %211 = arith.index_cast %c7_i32 : i32 to index
      %c0_104 = arith.constant 0 : index
      %c0_105 = arith.constant 0 : index
      %212 = vector.load %arg19[%211, %c0_104, %c0_105] : memref<8x32x32xf32, #tpu.memory_space<vmem>>, vector<1x32x32xf32>
      %213 = vector.shape_cast %212 : vector<1x32x32xf32> to vector<32x32xf32>
      %214 = vector.shape_cast %210 : vector<32x32xf32> to vector<1x32x32xf32>
      tpu.vector_store %arg19[%211, %c0_104, %c0_105], %214 {strides = array<i32>} : memref<8x32x32xf32, #tpu.memory_space<vmem>>, vector<1x32x32xf32>,
      %c8_i32_106 = arith.constant 8 : i32
      %215 = vector.extract_strided_slice %91 {offsets = [0, 64], sizes = [8, 32], strides = [1, 1]} : vector<8x128xf32> to vector<8x32xf32>
      %216 = vector.shape_cast %215 : vector<8x32xf32> to vector<8x32x1xf32>
      %c0_107 = arith.constant 0 : index
      %c0_108 = arith.constant 0 : index
      %c0_109 = arith.constant 0 : index
      %217 = vector.load %arg19[%c0_107, %c0_108, %c0_109] : memref<8x32x32xf32, #tpu.memory_space<vmem>>, vector<8x32x32xf32>
      %218 = vector.broadcast %216 : vector<8x32x1xf32> to vector<8x32x32xf32>
      %219 = arith.mulf %218, %217 : vector<8x32x32xf32>
      %cst_110 = arith.constant dense<0.000000e+00> : vector<8x32xf32>
      %220 = vector.multi_reduction <add>, %219, %cst_110 [1] : vector<8x32x32xf32> to vector<8x32xf32>
      %221 = arith.index_cast %89 : i32 to index
      %c0_111 = arith.constant 0 : index
      %222 = vector.load %arg17[%221, %c0_111] : memref<16x32xf32, #tpu.memory_space<vmem>>, vector<8x32xf32>
      tpu.vector_store %arg17[%221, %c0_111], %220 {strides = array<i32>} : memref<16x32xf32, #tpu.memory_space<vmem>>, vector<8x32xf32>,
      %c1_i32_112 = arith.constant 1 : i32
    }
    %c2_i32_30 = arith.constant 2 : i32
    %c0_31 = arith.constant 0 : index
    %c0_32 = arith.constant 0 : index
    %65 = vector.load %arg17[%c0_31, %c0_32] : memref<16x32xf32, #tpu.memory_space<vmem>>, vector<16x32xf32>
    %c0_33 = arith.constant 0 : index
    %c0_34 = arith.constant 0 : index
    %c0_35 = arith.constant 0 : index
    %66 = vector.load %arg9[%c0_33, %c0_34, %c0_35] : memref<1x1x32xf32, #tpu.memory_space<vmem>>, vector<1x1x32xf32>
    %67 = vector.shape_cast %66 : vector<1x1x32xf32> to vector<1x32xf32>
    %68 = vector.broadcast %67 : vector<1x32xf32> to vector<16x32xf32>
    %69 = arith.mulf %54, %68 : vector<16x32xf32>
    %70 = arith.addf %65, %69 : vector<16x32xf32>
    %cst_36 = arith.constant 0.000000e+00 : f32
    %71 = vector.broadcast %cst_36 : f32 to vector<16x32xf32>
    %72 = arith.subf %71, %8 : vector<16x32xf32>
    %73 = math.exp %72 : vector<16x32xf32>
    %cst_37 = arith.constant 1.000000e+00 : f32
    %74 = vector.broadcast %cst_37 : f32 to vector<16x32xf32>
    %75 = arith.addf %74, %73 : vector<16x32xf32>
    %76 = tpu.reciprocal %75 {approx = true} : vector<16x32xf32> -> vector<16x32xf32>
    %77 = arith.mulf %8, %76 : vector<16x32xf32>
    %78 = arith.mulf %70, %77 : vector<16x32xf32>
    %c1_i32_38 = arith.constant 1 : i32
    %79 = arith.cmpi slt, %arg1, %c1_i32_38 : i32
    %80 = arith.extui %79 : i1 to i32
    %c0_i32_39 = arith.constant 0 : i32
    %81 = arith.cmpi ne, %80, %c0_i32_39 : i32
    scf.if %81 {
      %c0_42 = arith.constant 0 : index
      %c0_43 = arith.constant 0 : index
      %c0_44 = arith.constant 0 : index
      %85 = vector.load %arg10[%c0_42, %c0_43, %c0_44] : memref<1x32x16xf32, #tpu.memory_space<vmem>>, vector<1x32x16xf32>
      %86 = vector.shape_cast %85 : vector<1x32x16xf32> to vector<32x16xf32>
      %cst_45 = arith.constant dense<0.000000e+00> : vector<16x16xf32>
      %87 = tpu.matmul %78, %86, %cst_45 {dimension_numbers = #tpu.dot_dimension_numbers<[1], [0], [0], [1], [0, 0, 1, 1], [], []>} : vector<16x32xf32>, vector<32x16xf32>, vector<16x16xf32> -> vector<16x16xf32>
      %c0_46 = arith.constant 0 : index
      %c0_47 = arith.constant 0 : index
      %88 = vector.load %arg14[%c0_46, %c0_47] : memref<16x16xf32, #tpu.memory_space<vmem>>, vector<16x16xf32>
      tpu.vector_store %arg14[%c0_46, %c0_47], %87 {strides = array<i32>} : memref<16x16xf32, #tpu.memory_space<vmem>>, vector<16x16xf32>,
    } else {
    }
    %c1_i32_40 = arith.constant 1 : i32
    %82 = arith.cmpi eq, %arg1, %c1_i32_40 : i32
    %83 = arith.extui %82 : i1 to i32
    %c0_i32_41 = arith.constant 0 : i32
    %84 = arith.cmpi ne, %83, %c0_i32_41 : i32
    scf.if %84 {
      %c0_42 = arith.constant 0 : index
      %c0_43 = arith.constant 0 : index
      %85 = vector.load %arg11[%c0_42, %c0_43] : memref<32x128xf32, #tpu.memory_space<vmem>>, vector<32x128xf32>
      %cst_44 = arith.constant dense<0.000000e+00> : vector<16x128xf32>
      %86 = tpu.matmul %78, %85, %cst_44 {dimension_numbers = #tpu.dot_dimension_numbers<[1], [0], [0], [1], [0, 0, 1, 1], [], []>} : vector<16x32xf32>, vector<32x128xf32>, vector<16x128xf32> -> vector<16x128xf32>
      %c0_45 = arith.constant 0 : index
      %c0_46 = arith.constant 0 : index
      %87 = vector.load %arg12[%c0_45, %c0_46] : memref<1x128xf32, #tpu.memory_space<vmem>>, vector<1x128xf32>
      %88 = vector.broadcast %87 : vector<1x128xf32> to vector<16x128xf32>
      %89 = arith.addf %86, %88 : vector<16x128xf32>
      %90 = vector.shape_cast %89 : vector<16x128xf32> to vector<2x8x128xf32>
      %c0_47 = arith.constant 0 : index
      %c0_48 = arith.constant 0 : index
      %c0_49 = arith.constant 0 : index
      %91 = vector.load %arg13[%c0_47, %c0_48, %c0_49] : memref<2x8x128xf32, #tpu.memory_space<vmem>>, vector<2x8x128xf32>
      tpu.vector_store %arg13[%c0_47, %c0_48, %c0_49], %90 {strides = array<i32>} : memref<2x8x128xf32, #tpu.memory_space<vmem>>, vector<2x8x128xf32>,
    } else {
    }
    return
  }
  func.func @transform_0(%arg0: i32, %arg1: i32) -> (i32, i32, i32) {
    %c0_i32 = arith.constant 0 : i32
    %c0_i32_0 = arith.constant 0 : i32
    %c0_i32_1 = arith.constant 0 : i32
    return %arg0, %c0_i32, %c0_i32_0 : i32, i32, i32
  }
  func.func @transform_1(%arg0: i32, %arg1: i32) -> (i32, i32, i32) {
    %c0_i32 = arith.constant 0 : i32
    %c0_i32_0 = arith.constant 0 : i32
    %c0_i32_1 = arith.constant 0 : i32
    return %arg1, %c0_i32, %c0_i32_0 : i32, i32, i32
  }
  func.func @transform_2(%arg0: i32, %arg1: i32) -> (i32, i32, i32) {
    %c0_i32 = arith.constant 0 : i32
    %c0_i32_0 = arith.constant 0 : i32
    %c0_i32_1 = arith.constant 0 : i32
    return %arg1, %c0_i32, %c0_i32_0 : i32, i32, i32
  }
  func.func @transform_3(%arg0: i32, %arg1: i32) -> (i32, i32, i32) {
    %c0_i32 = arith.constant 0 : i32
    %c0_i32_0 = arith.constant 0 : i32
    %c0_i32_1 = arith.constant 0 : i32
    return %arg1, %c0_i32, %c0_i32_0 : i32, i32, i32
  }
  func.func @transform_4(%arg0: i32, %arg1: i32) -> (i32, i32, i32) {
    %c0_i32 = arith.constant 0 : i32
    %c0_i32_0 = arith.constant 0 : i32
    %c0_i32_1 = arith.constant 0 : i32
    return %arg1, %c0_i32, %c0_i32_0 : i32, i32, i32
  }
  func.func @transform_5(%arg0: i32, %arg1: i32) -> (i32, i32, i32) {
    %c0_i32 = arith.constant 0 : i32
    %c0_i32_0 = arith.constant 0 : i32
    %c0_i32_1 = arith.constant 0 : i32
    return %arg1, %c0_i32, %c0_i32_0 : i32, i32, i32
  }
  func.func @transform_6(%arg0: i32, %arg1: i32) -> (i32, i32, i32) {
    %c0_i32 = arith.constant 0 : i32
    %c0_i32_0 = arith.constant 0 : i32
    %c0_i32_1 = arith.constant 0 : i32
    return %arg1, %c0_i32, %c0_i32_0 : i32, i32, i32
  }
  func.func @transform_7(%arg0: i32, %arg1: i32) -> (i32, i32, i32) {
    %c0_i32 = arith.constant 0 : i32
    %c0_i32_0 = arith.constant 0 : i32
    %c0_i32_1 = arith.constant 0 : i32
    return %arg1, %c0_i32, %c0_i32_0 : i32, i32, i32
  }
  func.func @transform_8(%arg0: i32, %arg1: i32) -> (i32, i32, i32) {
    %c0_i32 = arith.constant 0 : i32
    %c0_i32_0 = arith.constant 0 : i32
    %c0_i32_1 = arith.constant 0 : i32
    return %arg1, %c0_i32, %c0_i32_0 : i32, i32, i32
  }
  func.func @transform_9(%arg0: i32, %arg1: i32) -> (i32, i32) {
    %c0_i32 = arith.constant 0 : i32
    %c0_i32_0 = arith.constant 0 : i32
    %c0_i32_1 = arith.constant 0 : i32
    return %c0_i32, %c0_i32_0 : i32, i32
  }
  func.func @transform_10(%arg0: i32, %arg1: i32) -> (i32, i32) {
    %c0_i32 = arith.constant 0 : i32
    %c0_i32_0 = arith.constant 0 : i32
    %c0_i32_1 = arith.constant 0 : i32
    return %c0_i32, %c0_i32_0 : i32, i32
  }
  func.func @transform_11(%arg0: i32, %arg1: i32) -> (i32, i32, i32) {
    %c0_i32 = arith.constant 0 : i32
    %c0_i32_0 = arith.constant 0 : i32
    %c0_i32_1 = arith.constant 0 : i32
    return %arg0, %c0_i32, %c0_i32_0 : i32, i32, i32
  }
}

</mosaic_0001>

<llo_original>
// kernel: tpu_custom_call.1
$region0: #{tpu_custom_call.1}
  #allocation0 [shape = 'u32[]', space=smem, size = 0x4, offset = 0x4, fixed_abs, tag = 'smem constant byte address 0x4 - core index']
  #allocation1 [shape = 'u32[144,128]{1,0:T(1,128)}', space=vmem, size = 0x12000, scoped, tag = 'internal scratch']
  #allocation2 [shape = 'f32[16,16]{1,0:T(8,128)}', space=vmem, size = 0x2000, scoped, tag = 'scratch operand']
  #allocation3 [shape = 'f32[16,32]{1,0:T(8,128)}', space=vmem, size = 0x2000, scoped, tag = 'scratch operand']
  #allocation4 [shape = 'f32[16,128]{1,0:T(8,128)}', space=vmem, size = 0x2000, scoped, tag = 'scratch operand']
  #allocation5 [shape = 'f32[16,32]{1,0:T(8,128)}', space=vmem, size = 0x2000, scoped, tag = 'scratch operand']
  #allocation6 [shape = 'f32[8,32,32]{2,1,0:T(8,128)}', space=vmem, size = 0x20000, scoped, tag = 'scratch operand']
  #allocation7 [shape = 'f32[8,32,32]{2,1,0:T(8,128)}', space=vmem, size = 0x20000, scoped, tag = 'scratch operand']
  %s0 = inlined_call_operand.hbm [shape: f32[2,8,16], index: 0, kind: input, shape index: {}]
  %s1 = inlined_call_operand.vmem [shape: f32[2,16,64], index: 1, kind: input, shape index: {}]
  %s2 = inlined_call_operand.hbm [shape: f32[2,4,32], index: 2, kind: input, shape index: {}]
  %s3 = inlined_call_operand.vmem [shape: f32[2,1,32], index: 3, kind: input, shape index: {}]
  %s4 = inlined_call_operand.vmem [shape: f32[2,32,128], index: 4, kind: input, shape index: {}]
  %s5 = inlined_call_operand.hbm [shape: f32[2,1,32], index: 5, kind: input, shape index: {}]
  %s6 = inlined_call_operand.hbm [shape: f32[2,32,32], index: 6, kind: input, shape index: {}]
  %s7 = inlined_call_operand.hbm [shape: f32[2,1,32], index: 7, kind: input, shape index: {}]
  %s8 = inlined_call_operand.vmem [shape: f32[2,32,16], index: 8, kind: input, shape index: {}]
  %s9 = inlined_call_operand.vmem [shape: f32[32,128], index: 9, kind: input, shape index: {}]
  %s10 = inlined_call_operand.vmem [shape: f32[1,128], index: 10, kind: input, shape index: {}]
  %s11 = inlined_call_operand.hbm [shape: f32[2,8,128], index: 11, kind: output, shape index: {}]
  %s12 = sld [smem:[#allocation0]]
  $region116: #{tpu_custom_call.1} parent=0
    _
  %s14 = ssub.s32 1, %s12
  %s15 = scalar_select 0, %s14, %s12
  $region1: #{tpu_custom_call.1} parent=0
    #allocation8 [shape = 'u8[8192]{0}', space=vmem, size = 0x2000, scoped, tag = 'input window, operand 0, single buffered']
    #allocation9 [shape = 's32[2]{0}', space=sflag, size = 0x8, scoped, tag = 'scoped memory for tpu_custom_call.1']
    #allocation10 [shape = 's32[2]{0}', space=sflag, size = 0x8, scoped, tag = 'scoped memory for tpu_custom_call.1']
    #allocation11 [shape = 'u8[4096]{0}', space=vmem, size = 0x1000, scoped, tag = 'input window, operand 2']
    #allocation12 [shape = 's32[2]{0}', space=sflag, size = 0x8, scoped, tag = 'scoped memory for tpu_custom_call.1']
    #allocation13 [shape = 'u8[1024]{0}', space=vmem, size = 0x400, scoped, tag = 'input window, operand 5']
    #allocation14 [shape = 'u8[32768]{0}', space=vmem, size = 0x8000, scoped, tag = 'input window, operand 6']
    #allocation15 [shape = 's32[2]{0}', space=sflag, size = 0x8, scoped, tag = 'scoped memory for tpu_custom_call.1']
    #allocation16 [shape = 'u8[1024]{0}', space=vmem, size = 0x400, scoped, tag = 'input window, operand 7']
    #allocation17 [shape = 'u8[8192]{0}', space=vmem, size = 0x2000, scoped, tag = 'output window, operand 0, single buffered']
    %16 = vsyncpa [#allocation9], 0
    %17 = vsyncpa [#allocation12], 0
    %s18 = scalar_lea.sflag [#allocation12], 1
    %19 = vsyncpa %s18, 0
    %20 = vsyncpa [#allocation15], 0
    %s21 = scalar_lea.sflag [#allocation15], 1
    %22 = vsyncpa %s21, 0
    %23 = vsyncpa [#allocation10], 0
    loop: start=0, step=1, limit=4
    $region2: #{tpu_custom_call.1} parent=1 // loop_pre_header
      _
    $region3: #{tpu_custom_call.1} parent=1 // loop_header
      %s25 = sphi 0, %s29
      %p26 = scmp.ge.s32.totalorder %s25, 4
      %s32 = sphi 0, %s44
      %s33 = sphi 0, %s40
      %s34 = sphi 0, %s32
      %s35 = sphi 0, %s33
      %s36 = sphi 0, %s34
      %s37 = sphi 0, %s35
      %s47 = sphi 0, %s49
      %s50 = sphi 0, %s47
      %s51 = sphi 0, %s50
      %s67 = sphi 0, %s51
      %s73 = sphi 0, %s75
      %s76 = sphi 0, %s73
      %s77 = sphi 0, %s76
      %s93 = sphi 0, %s77
      %s99 = sphi 0, %s101
      %s102 = sphi 0, %s99
      %s103 = sphi 0, %s102
      %s119 = sphi 0, %s103
      %s125 = sphi 0, %s127
      %s128 = sphi 0, %s125
      %s129 = sphi 0, %s128
      %s145 = sphi 0, %s129
      %s151 = sphi 0, %s153
      %s154 = sphi 0, %s151
      %s155 = sphi 0, %s154
      %s171 = sphi 0, %s155
      %s177 = sphi 0, %s179
      %s180 = sphi 0, %s177
      %s181 = sphi 0, %s180
      %s197 = sphi 0, %s181
      %s203 = sphi 0, %s205
      %s206 = sphi 0, %s203
      %s207 = sphi 0, %s206
      %s223 = sphi 0, %s207
      %s229 = sphi 0, %s231
      %s232 = sphi 0, %s229
      %s233 = sphi 0, %s232
      %s249 = sphi 0, %s233
      %s255 = sphi 0, %s257
      %s258 = sphi 0, %s255
      %s259 = sphi 0, %s258
      %s275 = sphi 0, %s259
      %s279 = sphi 0, %s279
      %s281 = sphi 0, %s279
      %s282 = sphi 0, %s281
      %s296 = sphi 0, %s282
      %s300 = sphi 0, %s300
      %s302 = sphi 0, %s300
      %s303 = sphi 0, %s302
      %s317 = sphi 0, %s303
      %s323 = sphi 0, %s325
      %s326 = sphi 0, %s323
      %s327 = sphi 0, %s326
      %s343 = sphi 0, %s327
    $region4: #{tpu_custom_call.1} parent=1 // loop_header_branch
      %28 = sbr.rel (%p26) target = $region8
    $region5: #{tpu_custom_call.1} parent=1 // loop_body
      %s30 = ssub.s32 %s25, 1
      %s31 = ssub.s32 %s25, 2
      %s38 = sadd.s32 1, %s33
      %p39 = scmp.ge.s32.totalorder %s38, 2
      %s40 = scalar_select %p39, 0, %s38
      %s41 = sadd.s32 1, %s32
      %s42 = scalar_select %p39, %s41, %s32
      %p43 = scmp.ge.s32.totalorder %s42, 1
      %s44 = scalar_select %p43, 0, %s42
      %s45 = ssub.s32 %s32, %s44
      %p46 = scmp.eq.s32.totalorder %s45, 0
      %s48 = sadd.s32 %s47, 1
      %s49 = scalar_select %p46, %s47, %s48
      %p52 = pneg %p46
      %p53 = scmp.eq.s32.totalorder %s25, 1
      %p54 = por %p52, %p53
      %p55 = scmp.ne.s32.totalorder %s47, %s50
      %p56 = scmp.eq.s32.totalorder %s25, 0
      %p57 = por %p55, %p56
      %p58 = scmp.ne.s32.totalorder %s47, %s50
      %p59 = scmp.eq.s32.totalorder %s30, 1
      %p60 = por %p58, %p59
      %p61 = scmp.ne.s32.totalorder %s50, %s51
      %p62 = scmp.eq.s32.totalorder %s30, 0
      %p63 = por %p61, %p62
      %p64 = scmp.ne.s32.totalorder %s50, %s51
      %p65 = scmp.eq.s32.totalorder %s31, 1
      %p66 = por %p64, %p65
      %p68 = scmp.ne.s32.totalorder %s51, %s67
      %p69 = scmp.eq.s32.totalorder %s31, 0
      %p70 = por %p68, %p69
      %s71 = ssub.s32 %s33, %s40
      %p72 = scmp.eq.s32.totalorder %s71, 0
      %s74 = sadd.s32 %s73, 1
      %s75 = scalar_select %p72, %s73, %s74
      %p78 = pneg %p72
      %p79 = scmp.eq.s32.totalorder %s25, 1
      %p80 = por %p78, %p79
      %p81 = scmp.ne.s32.totalorder %s73, %s76
      %p82 = scmp.eq.s32.totalorder %s25, 0
      %p83 = por %p81, %p82
      %p84 = scmp.ne.s32.totalorder %s73, %s76
      %p85 = scmp.eq.s32.totalorder %s30, 1
      %p86 = por %p84, %p85
      %p87 = scmp.ne.s32.totalorder %s76, %s77
      %p88 = scmp.eq.s32.totalorder %s30, 0
      %p89 = por %p87, %p88
      %p90 = scmp.ne.s32.totalorder %s76, %s77
      %p91 = scmp.eq.s32.totalorder %s31, 1
      %p92 = por %p90, %p91
      %p94 = scmp.ne.s32.totalorder %s77, %s93
      %p95 = scmp.eq.s32.totalorder %s31, 0
      %p96 = por %p94, %p95
      %s97 = ssub.s32 %s33, %s40
      %p98 = scmp.eq.s32.totalorder %s97, 0
      %s100 = sadd.s32 %s99, 1
      %s101 = scalar_select %p98, %s99, %s100
      %p104 = pneg %p98
      %p105 = scmp.eq.s32.totalorder %s25, 1
      %p106 = por %p104, %p105
      %p107 = scmp.ne.s32.totalorder %s99, %s102
      %p108 = scmp.eq.s32.totalorder %s25, 0
      %p109 = por %p107, %p108
      %p110 = scmp.ne.s32.totalorder %s99, %s102
      %p111 = scmp.eq.s32.totalorder %s30, 1
      %p112 = por %p110, %p111
      %p113 = scmp.ne.s32.totalorder %s102, %s103
      %p114 = scmp.eq.s32.totalorder %s30, 0
      %p115 = por %p113, %p114
      %p116 = scmp.ne.s32.totalorder %s102, %s103
      %p117 = scmp.eq.s32.totalorder %s31, 1
      %p118 = por %p116, %p117
      %p120 = scmp.ne.s32.totalorder %s103, %s119
      %p121 = scmp.eq.s32.totalorder %s31, 0
      %p122 = por %p120, %p121
      %s123 = ssub.s32 %s33, %s40
      %p124 = scmp.eq.s32.totalorder %s123, 0
      %s126 = sadd.s32 %s125, 1
      %s127 = scalar_select %p124, %s125, %s126
      %p130 = pneg %p124
      %p131 = scmp.eq.s32.totalorder %s25, 1
      %p132 = por %p130, %p131
      %p133 = scmp.ne.s32.totalorder %s125, %s128
      %p134 = scmp.eq.s32.totalorder %s25, 0
      %p135 = por %p133, %p134
      %p136 = scmp.ne.s32.totalorder %s125, %s128
      %p137 = scmp.eq.s32.totalorder %s30, 1
      %p138 = por %p136, %p137
      %p139 = scmp.ne.s32.totalorder %s128, %s129
      %p140 = scmp.eq.s32.totalorder %s30, 0
      %p141 = por %p139, %p140
      %p142 = scmp.ne.s32.totalorder %s128, %s129
      %p143 = scmp.eq.s32.totalorder %s31, 1
      %p144 = por %p142, %p143
      %p146 = scmp.ne.s32.totalorder %s129, %s145
      %p147 = scmp.eq.s32.totalorder %s31, 0
      %p148 = por %p146, %p147
      %s149 = ssub.s32 %s33, %s40
      %p150 = scmp.eq.s32.totalorder %s149, 0
      %s152 = sadd.s32 %s151, 1
      %s153 = scalar_select %p150, %s151, %s152
      %p156 = pneg %p150
      %p157 = scmp.eq.s32.totalorder %s25, 1
      %p158 = por %p156, %p157
      %p159 = scmp.ne.s32.totalorder %s151, %s154
      %p160 = scmp.eq.s32.totalorder %s25, 0
      %p161 = por %p159, %p160
      %p162 = scmp.ne.s32.totalorder %s151, %s154
      %p163 = scmp.eq.s32.totalorder %s30, 1
      %p164 = por %p162, %p163
      %p165 = scmp.ne.s32.totalorder %s154, %s155
      %p166 = scmp.eq.s32.totalorder %s30, 0
      %p167 = por %p165, %p166
      %p168 = scmp.ne.s32.totalorder %s154, %s155
      %p169 = scmp.eq.s32.totalorder %s31, 1
      %p170 = por %p168, %p169
      %p172 = scmp.ne.s32.totalorder %s155, %s171
      %p173 = scmp.eq.s32.totalorder %s31, 0
      %p174 = por %p172, %p173
      %s175 = ssub.s32 %s33, %s40
      %p176 = scmp.eq.s32.totalorder %s175, 0
      %s178 = sadd.s32 %s177, 1
      %s179 = scalar_select %p176, %s177, %s178
      %p182 = pneg %p176
      %p183 = scmp.eq.s32.totalorder %s25, 1
      %p184 = por %p182, %p183
      %p185 = scmp.ne.s32.totalorder %s177, %s180
      %p186 = scmp.eq.s32.totalorder %s25, 0
      %p187 = por %p185, %p186
      %p188 = scmp.ne.s32.totalorder %s177, %s180
      %p189 = scmp.eq.s32.totalorder %s30, 1
      %p190 = por %p188, %p189
      %p191 = scmp.ne.s32.totalorder %s180, %s181
      %p192 = scmp.eq.s32.totalorder %s30, 0
      %p193 = por %p191, %p192
      %p194 = scmp.ne.s32.totalorder %s180, %s181
      %p195 = scmp.eq.s32.totalorder %s31, 1
      %p196 = por %p194, %p195
      %p198 = scmp.ne.s32.totalorder %s181, %s197
      %p199 = scmp.eq.s32.totalorder %s31, 0
      %p200 = por %p198, %p199
      %s201 = ssub.s32 %s33, %s40
      %p202 = scmp.eq.s32.totalorder %s201, 0
      %s204 = sadd.s32 %s203, 1
      %s205 = scalar_select %p202, %s203, %s204
      %p208 = pneg %p202
      %p209 = scmp.eq.s32.totalorder %s25, 1
      %p210 = por %p208, %p209
      %p211 = scmp.ne.s32.totalorder %s203, %s206
      %p212 = scmp.eq.s32.totalorder %s25, 0
      %p213 = por %p211, %p212
      %p214 = scmp.ne.s32.totalorder %s203, %s206
      %p215 = scmp.eq.s32.totalorder %s30, 1
      %p216 = por %p214, %p215
      %p217 = scmp.ne.s32.totalorder %s206, %s207
      %p218 = scmp.eq.s32.totalorder %s30, 0
      %p219 = por %p217, %p218
      %p220 = scmp.ne.s32.totalorder %s206, %s207
      %p221 = scmp.eq.s32.totalorder %s31, 1
      %p222 = por %p220, %p221
      %p224 = scmp.ne.s32.totalorder %s207, %s223
      %p225 = scmp.eq.s32.totalorder %s31, 0
      %p226 = por %p224, %p225
      %s227 = ssub.s32 %s33, %s40
      %p228 = scmp.eq.s32.totalorder %s227, 0
      %s230 = sadd.s32 %s229, 1
      %s231 = scalar_select %p228, %s229, %s230
      %p234 = pneg %p228
      %p235 = scmp.eq.s32.totalorder %s25, 1
      %p236 = por %p234, %p235
      %p237 = scmp.ne.s32.totalorder %s229, %s232
      %p238 = scmp.eq.s32.totalorder %s25, 0
      %p239 = por %p237, %p238
      %p240 = scmp.ne.s32.totalorder %s229, %s232
      %p241 = scmp.eq.s32.totalorder %s30, 1
      %p242 = por %p240, %p241
      %p243 = scmp.ne.s32.totalorder %s232, %s233
      %p244 = scmp.eq.s32.totalorder %s30, 0
      %p245 = por %p243, %p244
      %p246 = scmp.ne.s32.totalorder %s232, %s233
      %p247 = scmp.eq.s32.totalorder %s31, 1
      %p248 = por %p246, %p247
      %p250 = scmp.ne.s32.totalorder %s233, %s249
      %p251 = scmp.eq.s32.totalorder %s31, 0
      %p252 = por %p250, %p251
      %s253 = ssub.s32 %s33, %s40
      %p254 = scmp.eq.s32.totalorder %s253, 0
      %s256 = sadd.s32 %s255, 1
      %s257 = scalar_select %p254, %s255, %s256
      %p260 = pneg %p254
      %p261 = scmp.eq.s32.totalorder %s25, 1
      %p262 = por %p260, %p261
      %p263 = scmp.ne.s32.totalorder %s255, %s258
      %p264 = scmp.eq.s32.totalorder %s25, 0
      %p265 = por %p263, %p264
      %p266 = scmp.ne.s32.totalorder %s255, %s258
      %p267 = scmp.eq.s32.totalorder %s30, 1
      %p268 = por %p266, %p267
      %p269 = scmp.ne.s32.totalorder %s258, %s259
      %p270 = scmp.eq.s32.totalorder %s30, 0
      %p271 = por %p269, %p270
      %p272 = scmp.ne.s32.totalorder %s258, %s259
      %p273 = scmp.eq.s32.totalorder %s31, 1
      %p274 = por %p272, %p273
      %p276 = scmp.ne.s32.totalorder %s259, %s275
      %p277 = scmp.eq.s32.totalorder %s31, 0
      %p278 = por %p276, %p277
      %s280 = sadd.s32 %s279, 1
      %p283 = scmp.eq.s32.totalorder %s25, 1
      %p284 = scmp.ne.s32.totalorder %s279, %s281
      %p285 = scmp.eq.s32.totalorder %s25, 0
      %p286 = por %p284, %p285
      %p287 = scmp.ne.s32.totalorder %s279, %s281
      %p288 = scmp.eq.s32.totalorder %s30, 1
      %p289 = por %p287, %p288
      %p290 = scmp.ne.s32.totalorder %s281, %s282
      %p291 = scmp.eq.s32.totalorder %s30, 0
      %p292 = por %p290, %p291
      %p293 = scmp.ne.s32.totalorder %s281, %s282
      %p294 = scmp.eq.s32.totalorder %s31, 1
      %p295 = por %p293, %p294
      %p297 = scmp.ne.s32.totalorder %s282, %s296
      %p298 = scmp.eq.s32.totalorder %s31, 0
      %p299 = por %p297, %p298
      %s301 = sadd.s32 %s300, 1
      %p304 = scmp.eq.s32.totalorder %s25, 1
      %p305 = scmp.ne.s32.totalorder %s300, %s302
      %p306 = scmp.eq.s32.totalorder %s25, 0
      %p307 = por %p305, %p306
      %p308 = scmp.ne.s32.totalorder %s300, %s302
      %p309 = scmp.eq.s32.totalorder %s30, 1
      %p310 = por %p308, %p309
      %p311 = scmp.ne.s32.totalorder %s302, %s303
      %p312 = scmp.eq.s32.totalorder %s30, 0
      %p313 = por %p311, %p312
      %p314 = scmp.ne.s32.totalorder %s302, %s303
      %p315 = scmp.eq.s32.totalorder %s31, 1
      %p316 = por %p314, %p315
      %p318 = scmp.ne.s32.totalorder %s303, %s317
      %p319 = scmp.eq.s32.totalorder %s31, 0
      %p320 = por %p318, %p319
      %s321 = ssub.s32 %s32, %s44
      %p322 = scmp.eq.s32.totalorder %s321, 0
      %s324 = sadd.s32 %s323, 1
      %s325 = scalar_select %p322, %s323, %s324
      %p328 = pneg %p322
      %p329 = scmp.eq.s32.totalorder %s25, 1
      %p330 = por %p328, %p329
      %p331 = scmp.ne.s32.totalorder %s323, %s326
      %p332 = scmp.eq.s32.totalorder %s25, 0
      %p333 = por %p331, %p332
      %p334 = scmp.ne.s32.totalorder %s323, %s326
      %p335 = scmp.eq.s32.totalorder %s30, 1
      %p336 = por %p334, %p335
      %p337 = scmp.ne.s32.totalorder %s326, %s327
      %p338 = scmp.eq.s32.totalorder %s30, 0
      %p339 = por %p337, %p338
      %p340 = scmp.ne.s32.totalorder %s326, %s327
      %p341 = scmp.eq.s32.totalorder %s31, 1
      %p342 = por %p340, %p341
      %p344 = scmp.ne.s32.totalorder %s327, %s343
      %p345 = scmp.eq.s32.totalorder %s31, 0
      %p346 = por %p344, %p345
      %p347 = scmp.le.s32.totalorder 1, %s25
      %p348 = scmp.lt.s32.totalorder %s25, 3
      %p349 = pnand %p347, %p348
      %p350 = pneg %p349
      // Predicated region
      $region9: #{tpu_custom_call.1} parent=5 // pred_check
        _
      $region10: #{tpu_custom_call.1} parent=5 // pred_check_branch
        %352 = sbr.rel (%p349) target = $region12
      $region11: #{tpu_custom_call.1} parent=5 // pred_region
        %s353 = ssub.s32 %s25, 1
        // Predicated region
        $region13: #{tpu_custom_call.1} parent=11 // pred_check
          %p354 = pneg %p63
        $region14: #{tpu_custom_call.1} parent=11 // pred_check_branch
          %356 = sbr.rel (%p354) target = $region16
        $region15: #{tpu_custom_call.1} parent=11 // pred_region
          %s357 = smul.u32 2, %s34
          %s359 = ssub.s32 256, 256
          %360 = vsyncadd [#allocation9], %s359
          %s361 = smul.addr %s357, 128
          %s362 = scalar_lea.hbm %s0, %s361
          %s363 = sshll.u32 [#allocation8], 4
          %s364 = int_to_ptr.vmem [resolvable:$true] %s363
          %369 = dma.hbm_to_vmem [thread:$0]  %s362, 256, %s364, [#allocation9], 128, 128, 8
        $region16: #{tpu_custom_call.1} parent=11 // pred_fallthru
          _
        // Predicated region
        $region17: #{tpu_custom_call.1} parent=11 // pred_check
          %p370 = pneg %p292
        $region18: #{tpu_custom_call.1} parent=11 // pred_check_branch
          %372 = sbr.rel (%p370) target = $region20
        $region19: #{tpu_custom_call.1} parent=11 // pred_region
          _
        $region20: #{tpu_custom_call.1} parent=11 // pred_fallthru
          _
        // Predicated region
        $region21: #{tpu_custom_call.1} parent=11 // pred_check
          %p373 = pneg %p313
        $region22: #{tpu_custom_call.1} parent=11 // pred_check_branch
          %375 = sbr.rel (%p373) target = $region24
        $region23: #{tpu_custom_call.1} parent=11 // pred_region
          _
        $region24: #{tpu_custom_call.1} parent=11 // pred_fallthru
          _
      $region12: #{tpu_custom_call.1} parent=5 // pred_fallthru
        _
      %p376 = scmp.lt.s32.totalorder %s25, 2
      // Predicated region
      $region25: #{tpu_custom_call.1} parent=5 // pred_check
        %p377 = pneg %p376
      $region26: #{tpu_custom_call.1} parent=5 // pred_check_branch
        %379 = sbr.rel (%p377) target = $region28
      $region27: #{tpu_custom_call.1} parent=5 // pred_region
        // Predicated region
        $region29: #{tpu_custom_call.1} parent=27 // pred_check
          %p380 = pneg %p83
        $region30: #{tpu_custom_call.1} parent=27 // pred_check_branch
          %382 = sbr.rel (%p380) target = $region32
        $region31: #{tpu_custom_call.1} parent=27 // pred_region
          %p383 = scmp.lt.s32.totalorder %s33, 1
          %s384 = scalar_select %p383, %s33, 1
          %s385 = smul.addr %s384, 2
          %s386 = smul.addr %s385, 8
          %s387 = scalar_lea.vmem %s1, %s386
        $region32: #{tpu_custom_call.1} parent=27 // pred_fallthru
          _
        // Predicated region
        $region33: #{tpu_custom_call.1} parent=27 // pred_check
          %p388 = pneg %p109
        $region34: #{tpu_custom_call.1} parent=27 // pred_check_branch
          %390 = sbr.rel (%p388) target = $region36
        $region35: #{tpu_custom_call.1} parent=27 // pred_region
          %s391 = sand.u32 %s25, 1
          %s392 = scalar_lea.sflag [#allocation12], %s391
          %s393 = sand.u32 %s99, 1
          %s394 = smul.addr %s393, 4
          %s395 = scalar_lea.vmem [#allocation11], %s394
          %s397 = ssub.s32 64, 64
          %398 = vsyncadd %s392, %s397
          %s399 = smul.addr %s33, 64
          %s400 = scalar_lea.hbm %s2, %s399
          %s402 = sshll.u32 %s395, 4
          %s403 = int_to_ptr.vmem [resolvable:$true] %s402
          %405 = dma.hbm_to_vmem [thread:$0]  %s400, 64, %s403, %s392
        $region36: #{tpu_custom_call.1} parent=27 // pred_fallthru
          _
        // Predicated region
        $region37: #{tpu_custom_call.1} parent=27 // pred_check
          %p406 = pneg %p135
        $region38: #{tpu_custom_call.1} parent=27 // pred_check_branch
          %408 = sbr.rel (%p406) target = $region40
        $region39: #{tpu_custom_call.1} parent=27 // pred_region
          %p409 = scmp.lt.s32.totalorder %s33, 1
          %s410 = scalar_select %p409, %s33, 1
          %s411 = scalar_lea.vmem %s3, %s410
        $region40: #{tpu_custom_call.1} parent=27 // pred_fallthru
          _
        // Predicated region
        $region41: #{tpu_custom_call.1} parent=27 // pred_check
          %p412 = pneg %p161
        $region42: #{tpu_custom_call.1} parent=27 // pred_check_branch
          %414 = sbr.rel (%p412) target = $region44
        $region43: #{tpu_custom_call.1} parent=27 // pred_region
          %p415 = scmp.lt.s32.totalorder %s33, 1
          %s416 = scalar_select %p415, %s33, 1
          %s417 = smul.addr %s416, 4
          %s418 = smul.addr %s417, 8
          %s419 = scalar_lea.vmem %s4, %s418
        $region44: #{tpu_custom_call.1} parent=27 // pred_fallthru
          _
        // Predicated region
        $region45: #{tpu_custom_call.1} parent=27 // pred_check
          %p420 = pneg %p187
        $region46: #{tpu_custom_call.1} parent=27 // pred_check_branch
          %422 = sbr.rel (%p420) target = $region48
        $region47: #{tpu_custom_call.1} parent=27 // pred_region
          %s423 = sand.u32 %s25, 1
          %s424 = scalar_lea.sflag [#allocation12], %s423
          %s425 = sand.u32 %s177, 1
          %s426 = scalar_lea.vmem [#allocation13], %s425
          %s428 = ssub.s32 16, 16
          %429 = vsyncadd %s424, %s428
          %s430 = smul.addr %s33, 16
          %s431 = scalar_lea.hbm %s5, %s430
          %s433 = sshll.u32 %s426, 4
          %s434 = int_to_ptr.vmem [resolvable:$true] %s433
          %436 = dma.hbm_to_vmem [thread:$0]  %s431, 16, %s434, %s424
        $region48: #{tpu_custom_call.1} parent=27 // pred_fallthru
          _
        // Predicated region
        $region49: #{tpu_custom_call.1} parent=27 // pred_check
          %p437 = pneg %p213
        $region50: #{tpu_custom_call.1} parent=27 // pred_check_branch
          %439 = sbr.rel (%p437) target = $region52
        $region51: #{tpu_custom_call.1} parent=27 // pred_region
          %s440 = sand.u32 %s25, 1
          %s441 = scalar_lea.sflag [#allocation15], %s440
          %s442 = sand.u32 %s203, 1
          %s443 = smul.addr %s442, 32
          %s444 = scalar_lea.vmem [#allocation14], %s443
          %s446 = ssub.s32 512, 512
          %447 = vsyncadd %s441, %s446
          %s448 = smul.addr %s33, 4
          %s449 = smul.addr %s448, 128
          %s450 = scalar_lea.hbm %s6, %s449
          %s451 = sshll.u32 %s444, 4
          %s452 = int_to_ptr.vmem [resolvable:$true] %s451
          %457 = dma.hbm_to_vmem [thread:$0]  %s450, 512, %s452, %s441, 128, 128, 8
        $region52: #{tpu_custom_call.1} parent=27 // pred_fallthru
          _
        // Predicated region
        $region53: #{tpu_custom_call.1} parent=27 // pred_check
          %p458 = pneg %p239
        $region54: #{tpu_custom_call.1} parent=27 // pred_check_branch
          %460 = sbr.rel (%p458) target = $region56
        $region55: #{tpu_custom_call.1} parent=27 // pred_region
          %s461 = sand.u32 %s25, 1
          %s462 = scalar_lea.sflag [#allocation15], %s461
          %s463 = sand.u32 %s229, 1
          %s464 = scalar_lea.vmem [#allocation16], %s463
          %s466 = ssub.s32 16, 16
          %467 = vsyncadd %s462, %s466
          %s468 = smul.addr %s33, 16
          %s469 = scalar_lea.hbm %s7, %s468
          %s471 = sshll.u32 %s464, 4
          %s472 = int_to_ptr.vmem [resolvable:$true] %s471
          %474 = dma.hbm_to_vmem [thread:$0]  %s469, 16, %s472, %s462
        $region56: #{tpu_custom_call.1} parent=27 // pred_fallthru
          _
        // Predicated region
        $region57: #{tpu_custom_call.1} parent=27 // pred_check
          %p475 = pneg %p265
        $region58: #{tpu_custom_call.1} parent=27 // pred_check_branch
          %477 = sbr.rel (%p475) target = $region60
        $region59: #{tpu_custom_call.1} parent=27 // pred_region
          %p478 = scmp.lt.s32.totalorder %s33, 1
          %s479 = scalar_select %p478, %s33, 1
          %s480 = smul.addr %s479, 4
          %s481 = smul.addr %s480, 8
          %s482 = scalar_lea.vmem %s8, %s481
        $region60: #{tpu_custom_call.1} parent=27 // pred_fallthru
          _
      $region28: #{tpu_custom_call.1} parent=5 // pred_fallthru
        _
      %p483 = scmp.le.s32.totalorder 1, %s25
      %p484 = scmp.lt.s32.totalorder %s25, 3
      %p485 = pnand %p483, %p484
      %p486 = pneg %p485
      // Predicated region
      $region61: #{tpu_custom_call.1} parent=5 // pred_check
        _
      $region62: #{tpu_custom_call.1} parent=5 // pred_check_branch
        %488 = sbr.rel (%p485) target = $region64
      $region63: #{tpu_custom_call.1} parent=5 // pred_region
        %s489 = ssub.s32 %s25, 1
        // Predicated region
        $region65: #{tpu_custom_call.1} parent=63 // pred_check
          %p490 = pneg %p63
        $region66: #{tpu_custom_call.1} parent=63 // pred_check_branch
          %492 = sbr.rel (%p490) target = $region68
        $region67: #{tpu_custom_call.1} parent=63 // pred_region
          %493 = dma.done [#allocation9], 256
        $region68: #{tpu_custom_call.1} parent=63 // pred_fallthru
          _
        %s494 = sand.u32 %s30, 1
        %s495 = scalar_lea.sflag [#allocation12], %s494
        %s496 = sand.u32 %s102, 1
        %s497 = smul.addr %s496, 4
        %s498 = scalar_lea.vmem [#allocation11], %s497
        // Predicated region
        $region69: #{tpu_custom_call.1} parent=63 // pred_check
          %p499 = pneg %p115
        $region70: #{tpu_custom_call.1} parent=63 // pred_check_branch
          %501 = sbr.rel (%p499) target = $region72
        $region71: #{tpu_custom_call.1} parent=63 // pred_region
          %502 = dma.done %s495, 64
        $region72: #{tpu_custom_call.1} parent=63 // pred_fallthru
          _
        %s503 = sand.u32 %s30, 1
        %s504 = scalar_lea.sflag [#allocation12], %s503
        %s505 = sand.u32 %s180, 1
        %s506 = scalar_lea.vmem [#allocation13], %s505
        // Predicated region
        $region73: #{tpu_custom_call.1} parent=63 // pred_check
          %p507 = pneg %p193
        $region74: #{tpu_custom_call.1} parent=63 // pred_check_branch
          %509 = sbr.rel (%p507) target = $region76
        $region75: #{tpu_custom_call.1} parent=63 // pred_region
          %510 = dma.done %s504, 16
        $region76: #{tpu_custom_call.1} parent=63 // pred_fallthru
          _
        %s511 = sand.u32 %s30, 1
        %s512 = scalar_lea.sflag [#allocation15], %s511
        %s513 = sand.u32 %s206, 1
        %s514 = smul.addr %s513, 32
        %s515 = scalar_lea.vmem [#allocation14], %s514
        // Predicated region
        $region77: #{tpu_custom_call.1} parent=63 // pred_check
          %p516 = pneg %p219
        $region78: #{tpu_custom_call.1} parent=63 // pred_check_branch
          %518 = sbr.rel (%p516) target = $region80
        $region79: #{tpu_custom_call.1} parent=63 // pred_region
          %519 = dma.done %s512, 512
        $region80: #{tpu_custom_call.1} parent=63 // pred_fallthru
          _
        %s520 = sand.u32 %s30, 1
        %s521 = scalar_lea.sflag [#allocation15], %s520
        %s522 = sand.u32 %s232, 1
        %s523 = scalar_lea.vmem [#allocation16], %s522
        // Predicated region
        $region81: #{tpu_custom_call.1} parent=63 // pred_check
          %p524 = pneg %p245
        $region82: #{tpu_custom_call.1} parent=63 // pred_check_branch
          %526 = sbr.rel (%p524) target = $region84
        $region83: #{tpu_custom_call.1} parent=63 // pred_region
          %527 = dma.done %s521, 16
        $region84: #{tpu_custom_call.1} parent=63 // pred_fallthru
          _
        %p528 = pneg %p63
        %p529 = pneg %p60
        %p530 = scmp.lt.s32.totalorder %s35, 1
        %s531 = scalar_select %p530, %s35, 1
        %s532 = smul.addr %s531, 2
        %s533 = smul.addr %s532, 8
        %s534 = scalar_lea.vmem %s1, %s533
        %p535 = pneg %p89
        %p536 = pneg %p86
        %s537 = sand.u32 %s30, 1
        %s538 = scalar_lea.sflag [#allocation12], %s537
        %s539 = sand.u32 %s102, 1
        %s540 = smul.addr %s539, 4
        %s541 = scalar_lea.vmem [#allocation11], %s540
        %p542 = pneg %p115
        %p543 = pneg %p112
        %p544 = scmp.lt.s32.totalorder %s35, 1
        %s545 = scalar_select %p544, %s35, 1
        %s546 = scalar_lea.vmem %s3, %s545
        %p547 = pneg %p141
        %p548 = pneg %p138
        %p549 = scmp.lt.s32.totalorder %s35, 1
        %s550 = scalar_select %p549, %s35, 1
        %s551 = smul.addr %s550, 4
        %s552 = smul.addr %s551, 8
        %s553 = scalar_lea.vmem %s4, %s552
        %p554 = pneg %p167
        %p555 = pneg %p164
        %s556 = sand.u32 %s30, 1
        %s557 = scalar_lea.sflag [#allocation12], %s556
        %s558 = sand.u32 %s180, 1
        %s559 = scalar_lea.vmem [#allocation13], %s558
        %p560 = pneg %p193
        %p561 = pneg %p190
        %s562 = sand.u32 %s30, 1
        %s563 = scalar_lea.sflag [#allocation15], %s562
        %s564 = sand.u32 %s206, 1
        %s565 = smul.addr %s564, 32
        %s566 = scalar_lea.vmem [#allocation14], %s565
        %p567 = pneg %p219
        %p568 = pneg %p216
        %s569 = sand.u32 %s30, 1
        %s570 = scalar_lea.sflag [#allocation15], %s569
        %s571 = sand.u32 %s232, 1
        %s572 = scalar_lea.vmem [#allocation16], %s571
        %p573 = pneg %p245
        %p574 = pneg %p242
        %p575 = scmp.lt.s32.totalorder %s35, 1
        %s576 = scalar_select %p575, %s35, 1
        %s577 = smul.addr %s576, 4
        %s578 = smul.addr %s577, 8
        %s579 = scalar_lea.vmem %s8, %s578
        %p580 = pneg %p271
        %p581 = pneg %p268
        %p582 = pneg %p292
        %p583 = pneg %p289
        %p584 = pneg %p313
        %p585 = pneg %p310
        %p586 = pneg %p339
        %p587 = pneg %p336
        %s588 = smul.u32 2, %s34
        %p589 = scmp.lt.s32.totalorder %s35, 1
        %s590 = scalar_select %p589, %s35, 1
        %s591 = smul.addr %s590, 2
        %s592 = smul.addr %s591, 8
        %s593 = scalar_lea.vmem %s1, %s592
        %p594 = scmp.lt.s32.totalorder %s35, 1
        %s595 = scalar_select %p594, %s35, 1
        %s596 = scalar_lea.vmem %s3, %s595
        %p597 = scmp.lt.s32.totalorder %s35, 1
        %s598 = scalar_select %p597, %s35, 1
        %s599 = smul.addr %s598, 4
        %s600 = smul.addr %s599, 8
        %s601 = scalar_lea.vmem %s4, %s600
        %p602 = scmp.lt.s32.totalorder %s35, 1
        %s603 = scalar_select %p602, %s35, 1
        %s604 = smul.addr %s603, 4
        %s605 = smul.addr %s604, 8
        %s606 = scalar_lea.vmem %s8, %s605
        %s607 = smul.u32 2, %s34
        %p608 = scmp.eq.s32.totalorder %s35, 0
        // Predicated region
        $region85: #{tpu_custom_call.1} parent=63 // pred_check
          %p609 = pneg %p608
        $region86: #{tpu_custom_call.1} parent=63 // pred_check_branch
          %611 = sbr.rel (%p609) target = $region88
        $region87: #{tpu_custom_call.1} parent=63 // pred_region
          %v612 = vld [vmem:[#allocation8] sm:$0xff]
          %v613 = vld [vmem:[#allocation8 + $0x8] sm:$0xff]
          %vm614 = vcmask 130048
          %615 = vst.msk [vmem:[#allocation2] sm:$0xff] %vm614, %v612
          %616 = vst.msk [vmem:[#allocation2 + $0x8] sm:$0xff] %vm614, %v613
        $region88: #{tpu_custom_call.1} parent=63 // pred_fallthru
          _
        %v617 = vld [vmem:[#allocation2] sm:$0xff]
        %v618 = vld [vmem:[#allocation2 + $0x8] sm:$0xff]
        %v619 = vld [vmem:[%s593] sm:$0xff]
        %v620 = vld [vmem:[%s593 + $0x8] sm:$0xff]
        %vm621 = vcmask 130048
        %v623 = vsel %vm621, %v617, 0
        %v626 = vsel %vm621, %v618, 0
        %628 = vmatprep.subr.mxu0 0.0
        %629 = vmatpush1.msra.mxu0 %v619
        %630 = vmatprep.subr.mxu0 0.0
        %631 = vmatpush1.msra.mxu0 %v620
        %632 = vmatprep.subr.mxu0 0.0
        %633 = vmatpush1.msra.mxu0 0.0
        %634 = vmatprep.subr.mxu0 0.0
        %635 = vmatpush1.msra.mxu0 0.0
        %636 = vmatprep.subr.mxu0 0.0
        %637 = vmatpush1.msra.mxu0 0.0
        %638 = vmatprep.subr.mxu0 0.0
        %639 = vmatpush1.msra.mxu0 0.0
        %640 = vmatprep.subr.mxu0 0.0
        %641 = vmatpush1.msra.mxu0 0.0
        %642 = vmatprep.subr.mxu0 0.0
        %643 = vmatpush1.msra.mxu0 0.0
        %644 = vmatprep.subr.mxu0 0.0
        %645 = vmatpush1.msra.mxu0 0.0
        %646 = vmatprep.subr.mxu0 0.0
        %647 = vmatpush1.msra.mxu0 0.0
        %648 = vmatprep.subr.mxu0 0.0
        %649 = vmatpush1.msra.mxu0 0.0
        %650 = vmatprep.subr.mxu0 0.0
        %651 = vmatpush1.msra.mxu0 0.0
        %652 = vmatprep.subr.mxu0 0.0
        %653 = vmatpush1.msra.mxu0 0.0
        %654 = vmatprep.subr.mxu0 0.0
        %655 = vmatpush1.msra.mxu0 0.0
        %656 = vmatprep.subr.mxu0 0.0
        %657 = vmatpush1.msra.mxu0 0.0
        %658 = vmatprep.subr.mxu0 0.0
        %659 = vmatpush1.msra.mxu0 0.0
        %660 = vmatprep.subr.mxu0 0.0
        %661 = vmatpush1.msra.mxu0 0.0
        %662 = vmatprep.subr.mxu0 0.0
        %663 = vmatpush1.msra.mxu0 0.0
        %664 = vmatprep.subr.mxu0 0.0
        %665 = vmatpush1.msra.mxu0 0.0
        %666 = vmatprep.subr.mxu0 0.0
        %667 = vmatpush1.msra.mxu0 0.0
        %668 = vmatprep.subr.mxu0 0.0
        %669 = vmatpush1.msra.mxu0 0.0
        %670 = vmatprep.subr.mxu0 0.0
        %671 = vmatpush1.msra.mxu0 0.0
        %672 = vmatprep.subr.mxu0 0.0
        %673 = vmatpush1.msra.mxu0 0.0
        %674 = vmatprep.subr.mxu0 0.0
        %675 = vmatpush1.msra.mxu0 0.0
        %676 = vmatprep.subr.mxu0 0.0
        %677 = vmatpush1.msra.mxu0 0.0
        %678 = vmatprep.subr.mxu0 0.0
        %679 = vmatpush1.msra.mxu0 0.0
        %680 = vmatprep.subr.mxu0 0.0
        %681 = vmatpush1.msra.mxu0 0.0
        %682 = vmatprep.subr.mxu0 0.0
        %683 = vmatpush1.msra.mxu0 0.0
        %684 = vmatprep.subr.mxu0 0.0
        %685 = vmatpush1.msra.mxu0 0.0
        %686 = vmatprep.subr.mxu0 0.0
        %687 = vmatpush1.msra.mxu0 0.0
        %688 = vmatprep.subr.mxu0 0.0
        %689 = vmatpush1.msra.mxu0 0.0
        %690 = vmatprep.subr.mxu0 0.0
        %691 = vmatpush1.msra.mxu0 0.0
        %692 = vmatprep.mubr.f32.mxu0 0.0
        %693 = vmatmul.mubr.f32.gmra.mrb[0].mxu0 %v623
        %v694 = vpop.f32.mrb[0].mxu0
        %v695 = vadd.f32 0.0, %v694
        %v696 = vpop.f32.mrb[0].mxu0
        %697 = vmatprep.mubr.f32.mxu0 0.0
        %698 = vmatmul.mubr.f32.gmra.mrb[0].mxu0 %v626
        %v699 = vpop.f32.mrb[0].mxu0
        %v700 = vadd.f32 0.0, %v699
        %v701 = vpop.f32.mrb[0].mxu0
        %702 = vdwg.mxu0
        %v703 = vld [vmem:[%s498] sm:$0xf]
        %v706 = vrot.slane %v695, 5
        %v707 = vrot.slane %v700, 5
        %vm710 = vcmask 1042432
        %v711 = vsel %vm710, 0.0, %v706
        %v712 = vsel %vm710, 0.0, %v707
        %v713 = vlaneseq
        %v714 = vshrl.u32 %v713, 7
        %v715 = vsub.s32 0, %v714
        %v716 = vrot.slane %v703, %v715
        %v717 = vmul.f32 %v716, %v711
        %v718 = vmul.f32 %v716, %v712
        %v719 = vadd.f32 %v717, 0.0
        %v720 = vadd.f32 %v718, 0.0
        %v721 = vlaneseq
        %v722 = vshrl.u32 %v721, 7
        %v723 = vsub.s32 1, %v722
        %v724 = vrot.slane %v703, %v723
        %v725 = vmul.f32 %v724, %v711
        %v726 = vmul.f32 %v724, %v706
        %v727 = vmul.f32 %v724, %v712
        %v728 = vmul.f32 %v724, %v707
        %vm733 = vcmask 1046528
        %v734 = vrot.slane %v725, 1
        %v735 = vrot.slane %v726, 1
        %v736 = vsel %vm733, %v734, %v735
        %v737 = vrot.slane %v727, 1
        %v738 = vrot.slane %v728, 1
        %v739 = vsel %vm733, %v737, %v738
        %v742 = vadd.f32 %v719, %v736
        %v743 = vadd.f32 %v720, %v739
        %v744 = vlaneseq
        %v745 = vshrl.u32 %v744, 7
        %v746 = vsub.s32 2, %v745
        %v747 = vrot.slane %v703, %v746
        %v748 = vmul.f32 %v747, %v711
        %v749 = vmul.f32 %v747, %v706
        %v750 = vmul.f32 %v747, %v712
        %v751 = vmul.f32 %v747, %v707
        %vm756 = vcmask 1045504
        %v757 = vrot.slane %v748, 2
        %v758 = vrot.slane %v749, 2
        %v759 = vsel %vm756, %v757, %v758
        %v760 = vrot.slane %v750, 2
        %v761 = vrot.slane %v751, 2
        %v762 = vsel %vm756, %v760, %v761
        %v765 = vadd.f32 %v742, %v759
        %v766 = vadd.f32 %v743, %v762
        %v767 = vlaneseq
        %v768 = vshrl.u32 %v767, 7
        %v769 = vsub.s32 3, %v768
        %v770 = vrot.slane %v703, %v769
        %v771 = vmul.f32 %v770, %v711
        %v772 = vmul.f32 %v770, %v706
        %v773 = vmul.f32 %v770, %v712
        %v774 = vmul.f32 %v770, %v707
        %vm779 = vcmask 1044480
        %v780 = vrot.slane %v771, 3
        %v781 = vrot.slane %v772, 3
        %v782 = vsel %vm779, %v780, %v781
        %v783 = vrot.slane %v773, 3
        %v784 = vrot.slane %v774, 3
        %v785 = vsel %vm779, %v783, %v784
        %v788 = vadd.f32 %v765, %v782
        %v789 = vadd.f32 %v766, %v785
        %v790 = vld [vmem:[%s596] sm:$0x1]
        %v792 = vlaneseq
        %v793 = vshrl.u32 %v792, 7
        %v794 = vsub.s32 0, %v793
        %v795 = vrot.slane %v790, %v794
        %v797 = vadd.f32 %v788, %v795
        %v798 = vadd.f32 %v789, %v795
        %v799 = vsub.f32 0.0, %v797
        %v800 = vsub.f32 0.0, %v798
        %v801 = vmul.f32 %v799, 1.442695
        %v802 = vpow.pop %v801
        %v803 = vmul.f32 %v800, 1.442695
        %v804 = vpow.pop %v803
        %v805 = vadd.f32 %v802, 1.0
        %v806 = vadd.f32 %v804, 1.0
        %v807 = vrcp.pop %v805
        %v808 = vrcp.pop %v806
        %v809 = vmul.f32 %v797, %v807
        %v810 = vmul.f32 %v798, %v808
        %vm811 = vcmask 261120
        %812 = vst.msk [vmem:[#allocation3] sm:$0xff] %vm811, %v809
        %813 = vst.msk [vmem:[#allocation3 + $0x8] sm:$0xff] %vm811, %v810
        %v814 = vld [vmem:[%s601] sm:$0xff]
        %v815 = vld [vmem:[%s601 + $0x8] sm:$0xff]
        %v816 = vld [vmem:[%s601 + $0x10] sm:$0xff]
        %v817 = vld [vmem:[%s601 + $0x18] sm:$0xff]
        %v819 = vsel %vm811, %v809, 0
        %v822 = vsel %vm811, %v810, 0
        %824 = vmatprep.subr.mxu0 0.0
        %825 = vmatpush1.msra.mxu0 %v814
        %826 = vmatprep.subr.mxu0 0.0
        %827 = vmatpush1.msra.mxu0 %v815
        %828 = vmatprep.subr.mxu0 0.0
        %829 = vmatpush1.msra.mxu0 %v816
        %830 = vmatprep.subr.mxu0 0.0
        %831 = vmatpush1.msra.mxu0 %v817
        %832 = vmatprep.subr.mxu0 0.0
        %833 = vmatpush1.msra.mxu0 0.0
        %834 = vmatprep.subr.mxu0 0.0
        %835 = vmatpush1.msra.mxu0 0.0
        %836 = vmatprep.subr.mxu0 0.0
        %837 = vmatpush1.msra.mxu0 0.0
        %838 = vmatprep.subr.mxu0 0.0
        %839 = vmatpush1.msra.mxu0 0.0
        %840 = vmatprep.subr.mxu0 0.0
        %841 = vmatpush1.msra.mxu0 0.0
        %842 = vmatprep.subr.mxu0 0.0
        %843 = vmatpush1.msra.mxu0 0.0
        %844 = vmatprep.subr.mxu0 0.0
        %845 = vmatpush1.msra.mxu0 0.0
        %846 = vmatprep.subr.mxu0 0.0
        %847 = vmatpush1.msra.mxu0 0.0
        %848 = vmatprep.subr.mxu0 0.0
        %849 = vmatpush1.msra.mxu0 0.0
        %850 = vmatprep.subr.mxu0 0.0
        %851 = vmatpush1.msra.mxu0 0.0
        %852 = vmatprep.subr.mxu0 0.0
        %853 = vmatpush1.msra.mxu0 0.0
        %854 = vmatprep.subr.mxu0 0.0
        %855 = vmatpush1.msra.mxu0 0.0
        %856 = vmatprep.subr.mxu0 0.0
        %857 = vmatpush1.msra.mxu0 0.0
        %858 = vmatprep.subr.mxu0 0.0
        %859 = vmatpush1.msra.mxu0 0.0
        %860 = vmatprep.subr.mxu0 0.0
        %861 = vmatpush1.msra.mxu0 0.0
        %862 = vmatprep.subr.mxu0 0.0
        %863 = vmatpush1.msra.mxu0 0.0
        %864 = vmatprep.subr.mxu0 0.0
        %865 = vmatpush1.msra.mxu0 0.0
        %866 = vmatprep.subr.mxu0 0.0
        %867 = vmatpush1.msra.mxu0 0.0
        %868 = vmatprep.subr.mxu0 0.0
        %869 = vmatpush1.msra.mxu0 0.0
        %870 = vmatprep.subr.mxu0 0.0
        %871 = vmatpush1.msra.mxu0 0.0
        %872 = vmatprep.subr.mxu0 0.0
        %873 = vmatpush1.msra.mxu0 0.0
        %874 = vmatprep.subr.mxu0 0.0
        %875 = vmatpush1.msra.mxu0 0.0
        %876 = vmatprep.subr.mxu0 0.0
        %877 = vmatpush1.msra.mxu0 0.0
        %878 = vmatprep.subr.mxu0 0.0
        %879 = vmatpush1.msra.mxu0 0.0
        %880 = vmatprep.subr.mxu0 0.0
        %881 = vmatpush1.msra.mxu0 0.0
        %882 = vmatprep.subr.mxu0 0.0
        %883 = vmatpush1.msra.mxu0 0.0
        %884 = vmatprep.subr.mxu0 0.0
        %885 = vmatpush1.msra.mxu0 0.0
        %886 = vmatprep.subr.mxu0 0.0
        %887 = vmatpush1.msra.mxu0 0.0
        %888 = vmatprep.mubr.f32.mxu0 0.0
        %889 = vmatmul.mubr.f32.gmra.mrb[0].mxu0 %v819
        %v890 = vpop.f32.mrb[0].mxu0
        %v891 = vadd.f32 0.0, %v890
        %v892 = vpop.f32.mrb[0].mxu0
        %893 = vmatprep.mubr.f32.mxu0 0.0
        %894 = vmatmul.mubr.f32.gmra.mrb[0].mxu0 %v822
        %v895 = vpop.f32.mrb[0].mxu0
        %v896 = vadd.f32 0.0, %v895
        %v897 = vpop.f32.mrb[0].mxu0
        %898 = vdwg.mxu0
        %899 = vst [vmem:[#allocation4] sm:$0xff] %v891
        %900 = vst [vmem:[#allocation4 + $0x8] sm:$0xff] %v896
        %v901 = vld [vmem:[%s515] sm:$0xff]
        %v902 = vld [vmem:[%s515 + $0x8] sm:$0xff]
        %v903 = vld [vmem:[%s515 + $0x10] sm:$0xff]
        %v904 = vld [vmem:[%s515 + $0x18] sm:$0xff]
        %v905 = vld [vmem:[%s506] sm:$0x1]
        loop: start=0, step=1, limit=2
        $region89: #{tpu_custom_call.1} parent=63 // loop_pre_header
          _
        $region90: #{tpu_custom_call.1} parent=63 // loop_header
          %s907 = sphi 0, %s911
          %p908 = scmp.ge.s32.totalorder %s907, 2
        $region91: #{tpu_custom_call.1} parent=63 // loop_header_branch
          %910 = sbr.rel (%p908) target = $region95
        $region92: #{tpu_custom_call.1} parent=63 // loop_body
          %s912 = smul.u32 %s907, 8
          %s913 = scalar_lea.vmem [#allocation4], %s912
          %v914 = vld [vmem:[%s913] sm:$0xff]
          %v916 = vlaneseq
          %v917 = vshrl.u32 %v916, 7
          %v918 = vsub.s32 0, %v917
          %v919 = vrot.slane %v905, %v918
          %v921 = vadd.f32 %v914, %v919
          %vm922 = vcmp.gt.f32.partialorder %v921, 20.0
          %v923 = vmin.f32 %v921, 20.0
          %v924 = vmul.f32 %v923, 1.442695
          %v925 = vpow.pop %v924
          %v926 = vadd.f32 %v925, 1.0
          %v927 = vlog2.pop %v926
          %v928 = vmul.f32 %v927, 0.6931472
          %v929 = vmul.f32 -0.5, %v925
          %v930 = vadd.f32 %v929, 1.0
          %v931 = vmul.f32 %v930, %v925
          %v932 = vand.u32 2147483647, %v925
          %vm933 = vcmp.lt.f32.partialorder %v932, 0.0004427343
          %v934 = vsel %vm933, %v931, %v928
          %v935 = vsel %vm922, %v921, %v934
          %s936 = scalar_lea.vmem [#allocation3], %s912
          %v937 = vld [vmem:[%s936] sm:$0xff]
          %v939 = vcombine.high %v935, %v935
          %v941 = vunpack.c.l.s4 1966171168
          %v942 = vunpack.c.0.s8 %v941
          %v943 = vlaneseq
          %v944 = vshrl.u32 %v943, 7
          %v945 = vsub.s32 %v942, %v944
          %v946 = vrot.slane %v935, %v945
          %v948 = vunpack.c.l.s4 1966171168
          %v949 = vunpack.c.0.s8 %v948
          %v950 = vlaneseq
          %v951 = vshrl.u32 %v950, 7
          %v952 = vsub.s32 %v949, %v951
          %v953 = vrot.slane %v939, %v952
          %v954 = vcombine.high %v946, %v946
          %v955 = vcombine.high %v953, %v953
          %v957 = vunpack.c.l.s4 1966171168
          %v958 = vunpack.c.0.s8 %v957
          %v959 = vlaneseq
          %v960 = vshrl.u32 %v959, 7
          %v961 = vsub.s32 %v958, %v960
          %v962 = vrot.slane %v946, %v961
          %v964 = vunpack.c.l.s4 1966171168
          %v965 = vunpack.c.0.s8 %v964
          %v966 = vlaneseq
          %v967 = vshrl.u32 %v966, 7
          %v968 = vsub.s32 %v965, %v967
          %v969 = vrot.slane %v953, %v968
          %v971 = vunpack.c.l.s4 1966171168
          %v972 = vunpack.c.0.s8 %v971
          %v973 = vlaneseq
          %v974 = vshrl.u32 %v973, 7
          %v975 = vsub.s32 %v972, %v974
          %v976 = vrot.slane %v954, %v975
          %v978 = vunpack.c.l.s4 1966171168
          %v979 = vunpack.c.0.s8 %v978
          %v980 = vlaneseq
          %v981 = vshrl.u32 %v980, 7
          %v982 = vsub.s32 %v979, %v981
          %v983 = vrot.slane %v955, %v982
          %v984 = vcombine.high %v962, %v962
          %v985 = vcombine.high %v969, %v969
          %v986 = vcombine.high %v976, %v976
          %v987 = vcombine.high %v983, %v983
          %v988 = vlaneseq
          %v989 = vshrl.u32 %v988, 7
          %v990 = vsub.s32 0, %v989
          %v991 = vrot.slane %v962, %v990
          %v992 = vlaneseq
          %v993 = vshrl.u32 %v992, 7
          %v994 = vsub.s32 0, %v993
          %v995 = vrot.slane %v976, %v994
          %v996 = vlaneseq
          %v997 = vshrl.u32 %v996, 7
          %v998 = vsub.s32 0, %v997
          %v999 = vrot.slane %v984, %v998
          %v1000 = vlaneseq
          %v1001 = vshrl.u32 %v1000, 7
          %v1002 = vsub.s32 0, %v1001
          %v1003 = vrot.slane %v986, %v1002
          %v1004 = vlaneseq
          %v1005 = vshrl.u32 %v1004, 7
          %v1006 = vsub.s32 0, %v1005
          %v1007 = vrot.slane %v969, %v1006
          %v1008 = vlaneseq
          %v1009 = vshrl.u32 %v1008, 7
          %v1010 = vsub.s32 0, %v1009
          %v1011 = vrot.slane %v983, %v1010
          %v1012 = vlaneseq
          %v1013 = vshrl.u32 %v1012, 7
          %v1014 = vsub.s32 0, %v1013
          %v1015 = vrot.slane %v985, %v1014
          %v1016 = vlaneseq
          %v1017 = vshrl.u32 %v1016, 7
          %v1018 = vsub.s32 0, %v1017
          %v1019 = vrot.slane %v987, %v1018
          %v1028 = vmul.f32 %v991, %v901
          %v1029 = vmul.f32 %v991, %v902
          %v1030 = vmul.f32 %v991, %v903
          %v1031 = vmul.f32 %v991, %v904
          %v1032 = vmul.f32 %v995, %v901
          %v1033 = vmul.f32 %v995, %v902
          %v1034 = vmul.f32 %v995, %v903
          %v1035 = vmul.f32 %v995, %v904
          %v1036 = vmul.f32 %v999, %v901
          %v1037 = vmul.f32 %v999, %v902
          %v1038 = vmul.f32 %v999, %v903
          %v1039 = vmul.f32 %v999, %v904
          %v1040 = vmul.f32 %v1003, %v901
          %v1041 = vmul.f32 %v1003, %v902
          %v1042 = vmul.f32 %v1003, %v903
          %v1043 = vmul.f32 %v1003, %v904
          %v1044 = vmul.f32 %v1007, %v901
          %v1045 = vmul.f32 %v1007, %v902
          %v1046 = vmul.f32 %v1007, %v903
          %v1047 = vmul.f32 %v1007, %v904
          %v1048 = vmul.f32 %v1011, %v901
          %v1049 = vmul.f32 %v1011, %v902
          %v1050 = vmul.f32 %v1011, %v903
          %v1051 = vmul.f32 %v1011, %v904
          %v1052 = vmul.f32 %v1015, %v901
          %v1053 = vmul.f32 %v1015, %v902
          %v1054 = vmul.f32 %v1015, %v903
          %v1055 = vmul.f32 %v1015, %v904
          %v1056 = vmul.f32 %v1019, %v901
          %v1057 = vmul.f32 %v1019, %v902
          %v1058 = vmul.f32 %v1019, %v903
          %v1059 = vmul.f32 %v1019, %v904
          %v1060 = vmul.f32 %v1028, 1.442695
          %v1061 = vpow.pop %v1060
          %v1062 = vmul.f32 %v1029, 1.442695
          %v1063 = vpow.pop %v1062
          %v1064 = vmul.f32 %v1030, 1.442695
          %v1065 = vpow.pop %v1064
          %v1066 = vmul.f32 %v1031, 1.442695
          %v1067 = vpow.pop %v1066
          %v1068 = vmul.f32 %v1032, 1.442695
          %v1069 = vpow.pop %v1068
          %v1070 = vmul.f32 %v1033, 1.442695
          %v1071 = vpow.pop %v1070
          %v1072 = vmul.f32 %v1034, 1.442695
          %v1073 = vpow.pop %v1072
          %v1074 = vmul.f32 %v1035, 1.442695
          %v1075 = vpow.pop %v1074
          %v1076 = vmul.f32 %v1036, 1.442695
          %v1077 = vpow.pop %v1076
          %v1078 = vmul.f32 %v1037, 1.442695
          %v1079 = vpow.pop %v1078
          %v1080 = vmul.f32 %v1038, 1.442695
          %v1081 = vpow.pop %v1080
          %v1082 = vmul.f32 %v1039, 1.442695
          %v1083 = vpow.pop %v1082
          %v1084 = vmul.f32 %v1040, 1.442695
          %v1085 = vpow.pop %v1084
          %v1086 = vmul.f32 %v1041, 1.442695
          %v1087 = vpow.pop %v1086
          %v1088 = vmul.f32 %v1042, 1.442695
          %v1089 = vpow.pop %v1088
          %v1090 = vmul.f32 %v1043, 1.442695
          %v1091 = vpow.pop %v1090
          %v1092 = vmul.f32 %v1044, 1.442695
          %v1093 = vpow.pop %v1092
          %v1094 = vmul.f32 %v1045, 1.442695
          %v1095 = vpow.pop %v1094
          %v1096 = vmul.f32 %v1046, 1.442695
          %v1097 = vpow.pop %v1096
          %v1098 = vmul.f32 %v1047, 1.442695
          %v1099 = vpow.pop %v1098
          %v1100 = vmul.f32 %v1048, 1.442695
          %v1101 = vpow.pop %v1100
          %v1102 = vmul.f32 %v1049, 1.442695
          %v1103 = vpow.pop %v1102
          %v1104 = vmul.f32 %v1050, 1.442695
          %v1105 = vpow.pop %v1104
          %v1106 = vmul.f32 %v1051, 1.442695
          %v1107 = vpow.pop %v1106
          %v1108 = vmul.f32 %v1052, 1.442695
          %v1109 = vpow.pop %v1108
          %v1110 = vmul.f32 %v1053, 1.442695
          %v1111 = vpow.pop %v1110
          %v1112 = vmul.f32 %v1054, 1.442695
          %v1113 = vpow.pop %v1112
          %v1114 = vmul.f32 %v1055, 1.442695
          %v1115 = vpow.pop %v1114
          %v1116 = vmul.f32 %v1056, 1.442695
          %v1117 = vpow.pop %v1116
          %v1118 = vmul.f32 %v1057, 1.442695
          %v1119 = vpow.pop %v1118
          %v1120 = vmul.f32 %v1058, 1.442695
          %v1121 = vpow.pop %v1120
          %v1122 = vmul.f32 %v1059, 1.442695
          %v1123 = vpow.pop %v1122
          %1124 = vst.msk [vmem:[#allocation6] sm:$0xff] %vm811, %v1061
          %1125 = vst.msk [vmem:[#allocation6 + $0x8] sm:$0xff] %vm811, %v1063
          %1126 = vst.msk [vmem:[#allocation6 + $0x10] sm:$0xff] %vm811, %v1065
          %1127 = vst.msk [vmem:[#allocation6 + $0x18] sm:$0xff] %vm811, %v1067
          %1128 = vst.msk [vmem:[#allocation6 + $0x20] sm:$0xff] %vm811, %v1069
          %1129 = vst.msk [vmem:[#allocation6 + $0x28] sm:$0xff] %vm811, %v1071
          %1130 = vst.msk [vmem:[#allocation6 + $0x30] sm:$0xff] %vm811, %v1073
          %1131 = vst.msk [vmem:[#allocation6 + $0x38] sm:$0xff] %vm811, %v1075
          %1132 = vst.msk [vmem:[#allocation6 + $0x40] sm:$0xff] %vm811, %v1077
          %1133 = vst.msk [vmem:[#allocation6 + $0x48] sm:$0xff] %vm811, %v1079
          %1134 = vst.msk [vmem:[#allocation6 + $0x50] sm:$0xff] %vm811, %v1081
          %1135 = vst.msk [vmem:[#allocation6 + $0x58] sm:$0xff] %vm811, %v1083
          %1136 = vst.msk [vmem:[#allocation6 + $0x60] sm:$0xff] %vm811, %v1085
          %1137 = vst.msk [vmem:[#allocation6 + $0x68] sm:$0xff] %vm811, %v1087
          %1138 = vst.msk [vmem:[#allocation6 + $0x70] sm:$0xff] %vm811, %v1089
          %1139 = vst.msk [vmem:[#allocation6 + $0x78] sm:$0xff] %vm811, %v1091
          %1140 = vst.msk [vmem:[#allocation6 + $0x80] sm:$0xff] %vm811, %v1093
          %1141 = vst.msk [vmem:[#allocation6 + $0x88] sm:$0xff] %vm811, %v1095
          %1142 = vst.msk [vmem:[#allocation6 + $0x90] sm:$0xff] %vm811, %v1097
          %1143 = vst.msk [vmem:[#allocation6 + $0x98] sm:$0xff] %vm811, %v1099
          %1144 = vst.msk [vmem:[#allocation6 + $0xa0] sm:$0xff] %vm811, %v1101
          %1145 = vst.msk [vmem:[#allocation6 + $0xa8] sm:$0xff] %vm811, %v1103
          %1146 = vst.msk [vmem:[#allocation6 + $0xb0] sm:$0xff] %vm811, %v1105
          %1147 = vst.msk [vmem:[#allocation6 + $0xb8] sm:$0xff] %vm811, %v1107
          %1148 = vst.msk [vmem:[#allocation6 + $0xc0] sm:$0xff] %vm811, %v1109
          %1149 = vst.msk [vmem:[#allocation6 + $0xc8] sm:$0xff] %vm811, %v1111
          %1150 = vst.msk [vmem:[#allocation6 + $0xd0] sm:$0xff] %vm811, %v1113
          %1151 = vst.msk [vmem:[#allocation6 + $0xd8] sm:$0xff] %vm811, %v1115
          %1152 = vst.msk [vmem:[#allocation6 + $0xe0] sm:$0xff] %vm811, %v1117
          %1153 = vst.msk [vmem:[#allocation6 + $0xe8] sm:$0xff] %vm811, %v1119
          %1154 = vst.msk [vmem:[#allocation6 + $0xf0] sm:$0xff] %vm811, %v1121
          %1155 = vst.msk [vmem:[#allocation6 + $0xf8] sm:$0xff] %vm811, %v1123
          %v1156 = vlaneseq
          %v1157 = vshrl.u32 %v1156, 7
          %v1158 = vsub.s32 0, %v1157
          %v1159 = vrot.slane %v914, %v1158
          %s1161 = sor.u32 256, 32
          %1162 = vbcast.lane.b32.xlu0 %v1159, %s1161
          %v1163 = vpop.permute.xlu0 %1162
          %s1165 = sor.u32 256, 40
          %1166 = vbcast.lane.b32.xlu0 %v1159, %s1165
          %v1167 = vpop.permute.xlu0 %1166
          %s1169 = sor.u32 256, 48
          %1170 = vbcast.lane.b32.xlu0 %v1159, %s1169
          %v1171 = vpop.permute.xlu0 %1170
          %s1173 = sor.u32 256, 56
          %1174 = vbcast.lane.b32.xlu0 %v1159, %s1173
          %v1175 = vpop.permute.xlu0 %1174
          %v1176 = vlaneseq
          %v1177 = vshrl.u32 %v1176, 7
          %v1178 = vsub.s32 1, %v1177
          %v1179 = vrot.slane %v914, %v1178
          %s1181 = sor.u32 256, 32
          %1182 = vbcast.lane.b32.xlu0 %v1179, %s1181
          %v1183 = vpop.permute.xlu0 %1182
          %s1185 = sor.u32 256, 40
          %1186 = vbcast.lane.b32.xlu0 %v1179, %s1185
          %v1187 = vpop.permute.xlu0 %1186
          %s1189 = sor.u32 256, 48
          %1190 = vbcast.lane.b32.xlu0 %v1179, %s1189
          %v1191 = vpop.permute.xlu0 %1190
          %s1193 = sor.u32 256, 56
          %1194 = vbcast.lane.b32.xlu0 %v1179, %s1193
          %v1195 = vpop.permute.xlu0 %1194
          %v1196 = vlaneseq
          %v1197 = vshrl.u32 %v1196, 7
          %v1198 = vsub.s32 2, %v1197
          %v1199 = vrot.slane %v914, %v1198
          %s1201 = sor.u32 256, 32
          %1202 = vbcast.lane.b32.xlu0 %v1199, %s1201
          %v1203 = vpop.permute.xlu0 %1202
          %s1205 = sor.u32 256, 40
          %1206 = vbcast.lane.b32.xlu0 %v1199, %s1205
          %v1207 = vpop.permute.xlu0 %1206
          %s1209 = sor.u32 256, 48
          %1210 = vbcast.lane.b32.xlu0 %v1199, %s1209
          %v1211 = vpop.permute.xlu0 %1210
          %s1213 = sor.u32 256, 56
          %1214 = vbcast.lane.b32.xlu0 %v1199, %s1213
          %v1215 = vpop.permute.xlu0 %1214
          %v1216 = vlaneseq
          %v1217 = vshrl.u32 %v1216, 7
          %v1218 = vsub.s32 3, %v1217
          %v1219 = vrot.slane %v914, %v1218
          %s1221 = sor.u32 256, 32
          %1222 = vbcast.lane.b32.xlu0 %v1219, %s1221
          %v1223 = vpop.permute.xlu0 %1222
          %s1225 = sor.u32 256, 40
          %1226 = vbcast.lane.b32.xlu0 %v1219, %s1225
          %v1227 = vpop.permute.xlu0 %1226
          %s1229 = sor.u32 256, 48
          %1230 = vbcast.lane.b32.xlu0 %v1219, %s1229
          %v1231 = vpop.permute.xlu0 %1230
          %s1233 = sor.u32 256, 56
          %1234 = vbcast.lane.b32.xlu0 %v1219, %s1233
          %v1235 = vpop.permute.xlu0 %1234
          %v1236 = vlaneseq
          %v1237 = vshrl.u32 %v1236, 7
          %v1238 = vsub.s32 4, %v1237
          %v1239 = vrot.slane %v914, %v1238
          %s1241 = sor.u32 256, 32
          %1242 = vbcast.lane.b32.xlu0 %v1239, %s1241
          %v1243 = vpop.permute.xlu0 %1242
          %s1245 = sor.u32 256, 40
          %1246 = vbcast.lane.b32.xlu0 %v1239, %s1245
          %v1247 = vpop.permute.xlu0 %1246
          %s1249 = sor.u32 256, 48
          %1250 = vbcast.lane.b32.xlu0 %v1239, %s1249
          %v1251 = vpop.permute.xlu0 %1250
          %s1253 = sor.u32 256, 56
          %1254 = vbcast.lane.b32.xlu0 %v1239, %s1253
          %v1255 = vpop.permute.xlu0 %1254
          %v1256 = vlaneseq
          %v1257 = vshrl.u32 %v1256, 7
          %v1258 = vsub.s32 5, %v1257
          %v1259 = vrot.slane %v914, %v1258
          %s1261 = sor.u32 256, 32
          %1262 = vbcast.lane.b32.xlu0 %v1259, %s1261
          %v1263 = vpop.permute.xlu0 %1262
          %s1265 = sor.u32 256, 40
          %1266 = vbcast.lane.b32.xlu0 %v1259, %s1265
          %v1267 = vpop.permute.xlu0 %1266
          %s1269 = sor.u32 256, 48
          %1270 = vbcast.lane.b32.xlu0 %v1259, %s1269
          %v1271 = vpop.permute.xlu0 %1270
          %s1273 = sor.u32 256, 56
          %1274 = vbcast.lane.b32.xlu0 %v1259, %s1273
          %v1275 = vpop.permute.xlu0 %1274
          %v1276 = vlaneseq
          %v1277 = vshrl.u32 %v1276, 7
          %v1278 = vsub.s32 6, %v1277
          %v1279 = vrot.slane %v914, %v1278
          %s1281 = sor.u32 256, 32
          %1282 = vbcast.lane.b32.xlu0 %v1279, %s1281
          %v1283 = vpop.permute.xlu0 %1282
          %s1285 = sor.u32 256, 40
          %1286 = vbcast.lane.b32.xlu0 %v1279, %s1285
          %v1287 = vpop.permute.xlu0 %1286
          %s1289 = sor.u32 256, 48
          %1290 = vbcast.lane.b32.xlu0 %v1279, %s1289
          %v1291 = vpop.permute.xlu0 %1290
          %s1293 = sor.u32 256, 56
          %1294 = vbcast.lane.b32.xlu0 %v1279, %s1293
          %v1295 = vpop.permute.xlu0 %1294
          %v1296 = vlaneseq
          %v1297 = vshrl.u32 %v1296, 7
          %v1298 = vsub.s32 7, %v1297
          %v1299 = vrot.slane %v914, %v1298
          %s1301 = sor.u32 256, 32
          %1302 = vbcast.lane.b32.xlu0 %v1299, %s1301
          %v1303 = vpop.permute.xlu0 %1302
          %s1305 = sor.u32 256, 40
          %1306 = vbcast.lane.b32.xlu0 %v1299, %s1305
          %v1307 = vpop.permute.xlu0 %1306
          %s1309 = sor.u32 256, 48
          %1310 = vbcast.lane.b32.xlu0 %v1299, %s1309
          %v1311 = vpop.permute.xlu0 %1310
          %s1313 = sor.u32 256, 56
          %1314 = vbcast.lane.b32.xlu0 %v1299, %s1313
          %v1315 = vpop.permute.xlu0 %1314
          %v1316 = vmul.f32 %v935, %v937
          %v1318 = vcombine.high %v1316, %v1316
          %v1320 = vunpack.c.l.s4 1966171168
          %v1321 = vunpack.c.0.s8 %v1320
          %v1322 = vlaneseq
          %v1323 = vshrl.u32 %v1322, 7
          %v1324 = vsub.s32 %v1321, %v1323
          %v1325 = vrot.slane %v1316, %v1324
          %v1327 = vunpack.c.l.s4 1966171168
          %v1328 = vunpack.c.0.s8 %v1327
          %v1329 = vlaneseq
          %v1330 = vshrl.u32 %v1329, 7
          %v1331 = vsub.s32 %v1328, %v1330
          %v1332 = vrot.slane %v1318, %v1331
          %v1333 = vcombine.high %v1325, %v1325
          %v1334 = vcombine.high %v1332, %v1332
          %v1336 = vunpack.c.l.s4 1966171168
          %v1337 = vunpack.c.0.s8 %v1336
          %v1338 = vlaneseq
          %v1339 = vshrl.u32 %v1338, 7
          %v1340 = vsub.s32 %v1337, %v1339
          %v1341 = vrot.slane %v1325, %v1340
          %v1343 = vunpack.c.l.s4 1966171168
          %v1344 = vunpack.c.0.s8 %v1343
          %v1345 = vlaneseq
          %v1346 = vshrl.u32 %v1345, 7
          %v1347 = vsub.s32 %v1344, %v1346
          %v1348 = vrot.slane %v1332, %v1347
          %v1350 = vunpack.c.l.s4 1966171168
          %v1351 = vunpack.c.0.s8 %v1350
          %v1352 = vlaneseq
          %v1353 = vshrl.u32 %v1352, 7
          %v1354 = vsub.s32 %v1351, %v1353
          %v1355 = vrot.slane %v1333, %v1354
          %v1357 = vunpack.c.l.s4 1966171168
          %v1358 = vunpack.c.0.s8 %v1357
          %v1359 = vlaneseq
          %v1360 = vshrl.u32 %v1359, 7
          %v1361 = vsub.s32 %v1358, %v1360
          %v1362 = vrot.slane %v1334, %v1361
          %v1363 = vcombine.high %v1341, %v1341
          %v1364 = vcombine.high %v1348, %v1348
          %v1365 = vcombine.high %v1355, %v1355
          %v1366 = vcombine.high %v1362, %v1362
          %v1367 = vlaneseq
          %v1368 = vshrl.u32 %v1367, 7
          %v1369 = vsub.s32 0, %v1368
          %v1370 = vrot.slane %v1341, %v1369
          %v1371 = vlaneseq
          %v1372 = vshrl.u32 %v1371, 7
          %v1373 = vsub.s32 0, %v1372
          %v1374 = vrot.slane %v1355, %v1373
          %v1375 = vlaneseq
          %v1376 = vshrl.u32 %v1375, 7
          %v1377 = vsub.s32 0, %v1376
          %v1378 = vrot.slane %v1363, %v1377
          %v1379 = vlaneseq
          %v1380 = vshrl.u32 %v1379, 7
          %v1381 = vsub.s32 0, %v1380
          %v1382 = vrot.slane %v1365, %v1381
          %v1383 = vlaneseq
          %v1384 = vshrl.u32 %v1383, 7
          %v1385 = vsub.s32 0, %v1384
          %v1386 = vrot.slane %v1348, %v1385
          %v1387 = vlaneseq
          %v1388 = vshrl.u32 %v1387, 7
          %v1389 = vsub.s32 0, %v1388
          %v1390 = vrot.slane %v1362, %v1389
          %v1391 = vlaneseq
          %v1392 = vshrl.u32 %v1391, 7
          %v1393 = vsub.s32 0, %v1392
          %v1394 = vrot.slane %v1364, %v1393
          %v1395 = vlaneseq
          %v1396 = vshrl.u32 %v1395, 7
          %v1397 = vsub.s32 0, %v1396
          %v1398 = vrot.slane %v1366, %v1397
          %v1407 = vmul.f32 %v1163, %v1370
          %v1408 = vmul.f32 %v1167, %v1370
          %v1409 = vmul.f32 %v1171, %v1370
          %v1410 = vmul.f32 %v1175, %v1370
          %v1411 = vmul.f32 %v1183, %v1374
          %v1412 = vmul.f32 %v1187, %v1374
          %v1413 = vmul.f32 %v1191, %v1374
          %v1414 = vmul.f32 %v1195, %v1374
          %v1415 = vmul.f32 %v1203, %v1378
          %v1416 = vmul.f32 %v1207, %v1378
          %v1417 = vmul.f32 %v1211, %v1378
          %v1418 = vmul.f32 %v1215, %v1378
          %v1419 = vmul.f32 %v1223, %v1382
          %v1420 = vmul.f32 %v1227, %v1382
          %v1421 = vmul.f32 %v1231, %v1382
          %v1422 = vmul.f32 %v1235, %v1382
          %v1423 = vmul.f32 %v1243, %v1386
          %v1424 = vmul.f32 %v1247, %v1386
          %v1425 = vmul.f32 %v1251, %v1386
          %v1426 = vmul.f32 %v1255, %v1386
          %v1427 = vmul.f32 %v1263, %v1390
          %v1428 = vmul.f32 %v1267, %v1390
          %v1429 = vmul.f32 %v1271, %v1390
          %v1430 = vmul.f32 %v1275, %v1390
          %v1431 = vmul.f32 %v1283, %v1394
          %v1432 = vmul.f32 %v1287, %v1394
          %v1433 = vmul.f32 %v1291, %v1394
          %v1434 = vmul.f32 %v1295, %v1394
          %v1435 = vmul.f32 %v1303, %v1398
          %v1436 = vmul.f32 %v1307, %v1398
          %v1437 = vmul.f32 %v1311, %v1398
          %v1438 = vmul.f32 %v1315, %v1398
          %1439 = vst.msk [vmem:[#allocation7] sm:$0xff] %vm811, %v1407
          %1440 = vst.msk [vmem:[#allocation7 + $0x8] sm:$0xff] %vm811, %v1408
          %1441 = vst.msk [vmem:[#allocation7 + $0x10] sm:$0xff] %vm811, %v1409
          %1442 = vst.msk [vmem:[#allocation7 + $0x18] sm:$0xff] %vm811, %v1410
          %1443 = vst.msk [vmem:[#allocation7 + $0x20] sm:$0xff] %vm811, %v1411
          %1444 = vst.msk [vmem:[#allocation7 + $0x28] sm:$0xff] %vm811, %v1412
          %1445 = vst.msk [vmem:[#allocation7 + $0x30] sm:$0xff] %vm811, %v1413
          %1446 = vst.msk [vmem:[#allocation7 + $0x38] sm:$0xff] %vm811, %v1414
          %1447 = vst.msk [vmem:[#allocation7 + $0x40] sm:$0xff] %vm811, %v1415
          %1448 = vst.msk [vmem:[#allocation7 + $0x48] sm:$0xff] %vm811, %v1416
          %1449 = vst.msk [vmem:[#allocation7 + $0x50] sm:$0xff] %vm811, %v1417
          %1450 = vst.msk [vmem:[#allocation7 + $0x58] sm:$0xff] %vm811, %v1418
          %1451 = vst.msk [vmem:[#allocation7 + $0x60] sm:$0xff] %vm811, %v1419
          %1452 = vst.msk [vmem:[#allocation7 + $0x68] sm:$0xff] %vm811, %v1420
          %1453 = vst.msk [vmem:[#allocation7 + $0x70] sm:$0xff] %vm811, %v1421
          %1454 = vst.msk [vmem:[#allocation7 + $0x78] sm:$0xff] %vm811, %v1422
          %1455 = vst.msk [vmem:[#allocation7 + $0x80] sm:$0xff] %vm811, %v1423
          %1456 = vst.msk [vmem:[#allocation7 + $0x88] sm:$0xff] %vm811, %v1424
          %1457 = vst.msk [vmem:[#allocation7 + $0x90] sm:$0xff] %vm811, %v1425
          %1458 = vst.msk [vmem:[#allocation7 + $0x98] sm:$0xff] %vm811, %v1426
          %1459 = vst.msk [vmem:[#allocation7 + $0xa0] sm:$0xff] %vm811, %v1427
          %1460 = vst.msk [vmem:[#allocation7 + $0xa8] sm:$0xff] %vm811, %v1428
          %1461 = vst.msk [vmem:[#allocation7 + $0xb0] sm:$0xff] %vm811, %v1429
          %1462 = vst.msk [vmem:[#allocation7 + $0xb8] sm:$0xff] %vm811, %v1430
          %1463 = vst.msk [vmem:[#allocation7 + $0xc0] sm:$0xff] %vm811, %v1431
          %1464 = vst.msk [vmem:[#allocation7 + $0xc8] sm:$0xff] %vm811, %v1432
          %1465 = vst.msk [vmem:[#allocation7 + $0xd0] sm:$0xff] %vm811, %v1433
          %1466 = vst.msk [vmem:[#allocation7 + $0xd8] sm:$0xff] %vm811, %v1434
          %1467 = vst.msk [vmem:[#allocation7 + $0xe0] sm:$0xff] %vm811, %v1435
          %1468 = vst.msk [vmem:[#allocation7 + $0xe8] sm:$0xff] %vm811, %v1436
          %1469 = vst.msk [vmem:[#allocation7 + $0xf0] sm:$0xff] %vm811, %v1437
          %1470 = vst.msk [vmem:[#allocation7 + $0xf8] sm:$0xff] %vm811, %v1438
          %v1471 = vld [vmem:[#allocation6] sm:$0xff]
          %v1472 = vld [vmem:[#allocation6 + $0x8] sm:$0xff]
          %v1473 = vld [vmem:[#allocation6 + $0x10] sm:$0xff]
          %v1474 = vld [vmem:[#allocation6 + $0x18] sm:$0xff]
          %v1475 = vmul.f32 %v1471, 0.0
          %v1476 = vmul.f32 %v1472, 0.0
          %v1477 = vmul.f32 %v1473, 0.0
          %v1478 = vmul.f32 %v1474, 0.0
          %v1479 = vld [vmem:[#allocation7] sm:$0xff]
          %v1480 = vld [vmem:[#allocation7 + $0x8] sm:$0xff]
          %v1481 = vld [vmem:[#allocation7 + $0x10] sm:$0xff]
          %v1482 = vld [vmem:[#allocation7 + $0x18] sm:$0xff]
          %v1483 = vadd.f32 %v1475, %v1479
          %v1484 = vadd.f32 %v1476, %v1480
          %v1485 = vadd.f32 %v1477, %v1481
          %v1486 = vadd.f32 %v1478, %v1482
          %1487 = vst.msk [vmem:[#allocation7] sm:$0xff] %vm811, %v1483
          %1488 = vst.msk [vmem:[#allocation7 + $0x8] sm:$0xff] %vm811, %v1484
          %1489 = vst.msk [vmem:[#allocation7 + $0x10] sm:$0xff] %vm811, %v1485
          %1490 = vst.msk [vmem:[#allocation7 + $0x18] sm:$0xff] %vm811, %v1486
          %s1491 = scalar_lea.vmem [#allocation6], 32
          %v1492 = vld [vmem:[%s1491] sm:$0xff]
          %v1493 = vld [vmem:[%s1491 + $0x8] sm:$0xff]
          %v1494 = vld [vmem:[%s1491 + $0x10] sm:$0xff]
          %v1495 = vld [vmem:[%s1491 + $0x18] sm:$0xff]
          %v1496 = vmul.f32 %v1492, %v1483
          %v1497 = vmul.f32 %v1493, %v1484
          %v1498 = vmul.f32 %v1494, %v1485
          %v1499 = vmul.f32 %v1495, %v1486
          %s1500 = scalar_lea.vmem [#allocation7], 32
          %v1501 = vld [vmem:[%s1500] sm:$0xff]
          %v1502 = vld [vmem:[%s1500 + $0x8] sm:$0xff]
          %v1503 = vld [vmem:[%s1500 + $0x10] sm:$0xff]
          %v1504 = vld [vmem:[%s1500 + $0x18] sm:$0xff]
          %v1505 = vadd.f32 %v1496, %v1501
          %v1506 = vadd.f32 %v1497, %v1502
          %v1507 = vadd.f32 %v1498, %v1503
          %v1508 = vadd.f32 %v1499, %v1504
          %1509 = vst.msk [vmem:[%s1500] sm:$0xff] %vm811, %v1505
          %1510 = vst.msk [vmem:[%s1500 + $0x8] sm:$0xff] %vm811, %v1506
          %1511 = vst.msk [vmem:[%s1500 + $0x10] sm:$0xff] %vm811, %v1507
          %1512 = vst.msk [vmem:[%s1500 + $0x18] sm:$0xff] %vm811, %v1508
          %s1513 = scalar_lea.vmem [#allocation6], 64
          %v1514 = vld [vmem:[%s1513] sm:$0xff]
          %v1515 = vld [vmem:[%s1513 + $0x8] sm:$0xff]
          %v1516 = vld [vmem:[%s1513 + $0x10] sm:$0xff]
          %v1517 = vld [vmem:[%s1513 + $0x18] sm:$0xff]
          %v1518 = vmul.f32 %v1514, %v1505
          %v1519 = vmul.f32 %v1515, %v1506
          %v1520 = vmul.f32 %v1516, %v1507
          %v1521 = vmul.f32 %v1517, %v1508
          %s1522 = scalar_lea.vmem [#allocation7], 64
          %v1523 = vld [vmem:[%s1522] sm:$0xff]
          %v1524 = vld [vmem:[%s1522 + $0x8] sm:$0xff]
          %v1525 = vld [vmem:[%s1522 + $0x10] sm:$0xff]
          %v1526 = vld [vmem:[%s1522 + $0x18] sm:$0xff]
          %v1527 = vadd.f32 %v1518, %v1523
          %v1528 = vadd.f32 %v1519, %v1524
          %v1529 = vadd.f32 %v1520, %v1525
          %v1530 = vadd.f32 %v1521, %v1526
          %1531 = vst.msk [vmem:[%s1522] sm:$0xff] %vm811, %v1527
          %1532 = vst.msk [vmem:[%s1522 + $0x8] sm:$0xff] %vm811, %v1528
          %1533 = vst.msk [vmem:[%s1522 + $0x10] sm:$0xff] %vm811, %v1529
          %1534 = vst.msk [vmem:[%s1522 + $0x18] sm:$0xff] %vm811, %v1530
          %s1535 = scalar_lea.vmem [#allocation6], 96
          %v1536 = vld [vmem:[%s1535] sm:$0xff]
          %v1537 = vld [vmem:[%s1535 + $0x8] sm:$0xff]
          %v1538 = vld [vmem:[%s1535 + $0x10] sm:$0xff]
          %v1539 = vld [vmem:[%s1535 + $0x18] sm:$0xff]
          %v1540 = vmul.f32 %v1536, %v1527
          %v1541 = vmul.f32 %v1537, %v1528
          %v1542 = vmul.f32 %v1538, %v1529
          %v1543 = vmul.f32 %v1539, %v1530
          %s1544 = scalar_lea.vmem [#allocation7], 96
          %v1545 = vld [vmem:[%s1544] sm:$0xff]
          %v1546 = vld [vmem:[%s1544 + $0x8] sm:$0xff]
          %v1547 = vld [vmem:[%s1544 + $0x10] sm:$0xff]
          %v1548 = vld [vmem:[%s1544 + $0x18] sm:$0xff]
          %v1549 = vadd.f32 %v1540, %v1545
          %v1550 = vadd.f32 %v1541, %v1546
          %v1551 = vadd.f32 %v1542, %v1547
          %v1552 = vadd.f32 %v1543, %v1548
          %1553 = vst.msk [vmem:[%s1544] sm:$0xff] %vm811, %v1549
          %1554 = vst.msk [vmem:[%s1544 + $0x8] sm:$0xff] %vm811, %v1550
          %1555 = vst.msk [vmem:[%s1544 + $0x10] sm:$0xff] %vm811, %v1551
          %1556 = vst.msk [vmem:[%s1544 + $0x18] sm:$0xff] %vm811, %v1552
          %s1557 = scalar_lea.vmem [#allocation6], 128
          %v1558 = vld [vmem:[%s1557] sm:$0xff]
          %v1559 = vld [vmem:[%s1557 + $0x8] sm:$0xff]
          %v1560 = vld [vmem:[%s1557 + $0x10] sm:$0xff]
          %v1561 = vld [vmem:[%s1557 + $0x18] sm:$0xff]
          %v1562 = vmul.f32 %v1558, %v1549
          %v1563 = vmul.f32 %v1559, %v1550
          %v1564 = vmul.f32 %v1560, %v1551
          %v1565 = vmul.f32 %v1561, %v1552
          %s1566 = scalar_lea.vmem [#allocation7], 128
          %v1567 = vld [vmem:[%s1566] sm:$0xff]
          %v1568 = vld [vmem:[%s1566 + $0x8] sm:$0xff]
          %v1569 = vld [vmem:[%s1566 + $0x10] sm:$0xff]
          %v1570 = vld [vmem:[%s1566 + $0x18] sm:$0xff]
          %v1571 = vadd.f32 %v1562, %v1567
          %v1572 = vadd.f32 %v1563, %v1568
          %v1573 = vadd.f32 %v1564, %v1569
          %v1574 = vadd.f32 %v1565, %v1570
          %1575 = vst.msk [vmem:[%s1566] sm:$0xff] %vm811, %v1571
          %1576 = vst.msk [vmem:[%s1566 + $0x8] sm:$0xff] %vm811, %v1572
          %1577 = vst.msk [vmem:[%s1566 + $0x10] sm:$0xff] %vm811, %v1573
          %1578 = vst.msk [vmem:[%s1566 + $0x18] sm:$0xff] %vm811, %v1574
          %s1579 = scalar_lea.vmem [#allocation6], 160
          %v1580 = vld [vmem:[%s1579] sm:$0xff]
          %v1581 = vld [vmem:[%s1579 + $0x8] sm:$0xff]
          %v1582 = vld [vmem:[%s1579 + $0x10] sm:$0xff]
          %v1583 = vld [vmem:[%s1579 + $0x18] sm:$0xff]
          %v1584 = vmul.f32 %v1580, %v1571
          %v1585 = vmul.f32 %v1581, %v1572
          %v1586 = vmul.f32 %v1582, %v1573
          %v1587 = vmul.f32 %v1583, %v1574
          %s1588 = scalar_lea.vmem [#allocation7], 160
          %v1589 = vld [vmem:[%s1588] sm:$0xff]
          %v1590 = vld [vmem:[%s1588 + $0x8] sm:$0xff]
          %v1591 = vld [vmem:[%s1588 + $0x10] sm:$0xff]
          %v1592 = vld [vmem:[%s1588 + $0x18] sm:$0xff]
          %v1593 = vadd.f32 %v1584, %v1589
          %v1594 = vadd.f32 %v1585, %v1590
          %v1595 = vadd.f32 %v1586, %v1591
          %v1596 = vadd.f32 %v1587, %v1592
          %1597 = vst.msk [vmem:[%s1588] sm:$0xff] %vm811, %v1593
          %1598 = vst.msk [vmem:[%s1588 + $0x8] sm:$0xff] %vm811, %v1594
          %1599 = vst.msk [vmem:[%s1588 + $0x10] sm:$0xff] %vm811, %v1595
          %1600 = vst.msk [vmem:[%s1588 + $0x18] sm:$0xff] %vm811, %v1596
          %s1601 = scalar_lea.vmem [#allocation6], 192
          %v1602 = vld [vmem:[%s1601] sm:$0xff]
          %v1603 = vld [vmem:[%s1601 + $0x8] sm:$0xff]
          %v1604 = vld [vmem:[%s1601 + $0x10] sm:$0xff]
          %v1605 = vld [vmem:[%s1601 + $0x18] sm:$0xff]
          %v1606 = vmul.f32 %v1602, %v1593
          %v1607 = vmul.f32 %v1603, %v1594
          %v1608 = vmul.f32 %v1604, %v1595
          %v1609 = vmul.f32 %v1605, %v1596
          %s1610 = scalar_lea.vmem [#allocation7], 192
          %v1611 = vld [vmem:[%s1610] sm:$0xff]
          %v1612 = vld [vmem:[%s1610 + $0x8] sm:$0xff]
          %v1613 = vld [vmem:[%s1610 + $0x10] sm:$0xff]
          %v1614 = vld [vmem:[%s1610 + $0x18] sm:$0xff]
          %v1615 = vadd.f32 %v1606, %v1611
          %v1616 = vadd.f32 %v1607, %v1612
          %v1617 = vadd.f32 %v1608, %v1613
          %v1618 = vadd.f32 %v1609, %v1614
          %1619 = vst.msk [vmem:[%s1610] sm:$0xff] %vm811, %v1615
          %1620 = vst.msk [vmem:[%s1610 + $0x8] sm:$0xff] %vm811, %v1616
          %1621 = vst.msk [vmem:[%s1610 + $0x10] sm:$0xff] %vm811, %v1617
          %1622 = vst.msk [vmem:[%s1610 + $0x18] sm:$0xff] %vm811, %v1618
          %s1623 = scalar_lea.vmem [#allocation6], 224
          %v1624 = vld [vmem:[%s1623] sm:$0xff]
          %v1625 = vld [vmem:[%s1623 + $0x8] sm:$0xff]
          %v1626 = vld [vmem:[%s1623 + $0x10] sm:$0xff]
          %v1627 = vld [vmem:[%s1623 + $0x18] sm:$0xff]
          %v1628 = vmul.f32 %v1624, %v1615
          %v1629 = vmul.f32 %v1625, %v1616
          %v1630 = vmul.f32 %v1626, %v1617
          %v1631 = vmul.f32 %v1627, %v1618
          %s1632 = scalar_lea.vmem [#allocation7], 224
          %v1633 = vld [vmem:[%s1632] sm:$0xff]
          %v1634 = vld [vmem:[%s1632 + $0x8] sm:$0xff]
          %v1635 = vld [vmem:[%s1632 + $0x10] sm:$0xff]
          %v1636 = vld [vmem:[%s1632 + $0x18] sm:$0xff]
          %v1637 = vadd.f32 %v1628, %v1633
          %v1638 = vadd.f32 %v1629, %v1634
          %v1639 = vadd.f32 %v1630, %v1635
          %v1640 = vadd.f32 %v1631, %v1636
          %1641 = vst.msk [vmem:[%s1632] sm:$0xff] %vm811, %v1637
          %1642 = vst.msk [vmem:[%s1632 + $0x8] sm:$0xff] %vm811, %v1638
          %1643 = vst.msk [vmem:[%s1632 + $0x10] sm:$0xff] %vm811, %v1639
          %1644 = vst.msk [vmem:[%s1632 + $0x18] sm:$0xff] %vm811, %v1640
          %s1646 = sor.u32 256, 64
          %1647 = vbcast.lane.b32.xlu0 %v1159, %s1646
          %v1648 = vpop.permute.xlu0 %1647
          %s1650 = sor.u32 256, 72
          %1651 = vbcast.lane.b32.xlu0 %v1159, %s1650
          %v1652 = vpop.permute.xlu0 %1651
          %s1654 = sor.u32 256, 80
          %1655 = vbcast.lane.b32.xlu0 %v1159, %s1654
          %v1656 = vpop.permute.xlu0 %1655
          %s1658 = sor.u32 256, 88
          %1659 = vbcast.lane.b32.xlu0 %v1159, %s1658
          %v1660 = vpop.permute.xlu0 %1659
          %s1662 = sor.u32 256, 64
          %1663 = vbcast.lane.b32.xlu0 %v1179, %s1662
          %v1664 = vpop.permute.xlu0 %1663
          %s1666 = sor.u32 256, 72
          %1667 = vbcast.lane.b32.xlu0 %v1179, %s1666
          %v1668 = vpop.permute.xlu0 %1667
          %s1670 = sor.u32 256, 80
          %1671 = vbcast.lane.b32.xlu0 %v1179, %s1670
          %v1672 = vpop.permute.xlu0 %1671
          %s1674 = sor.u32 256, 88
          %1675 = vbcast.lane.b32.xlu0 %v1179, %s1674
          %v1676 = vpop.permute.xlu0 %1675
          %s1678 = sor.u32 256, 64
          %1679 = vbcast.lane.b32.xlu0 %v1199, %s1678
          %v1680 = vpop.permute.xlu0 %1679
          %s1682 = sor.u32 256, 72
          %1683 = vbcast.lane.b32.xlu0 %v1199, %s1682
          %v1684 = vpop.permute.xlu0 %1683
          %s1686 = sor.u32 256, 80
          %1687 = vbcast.lane.b32.xlu0 %v1199, %s1686
          %v1688 = vpop.permute.xlu0 %1687
          %s1690 = sor.u32 256, 88
          %1691 = vbcast.lane.b32.xlu0 %v1199, %s1690
          %v1692 = vpop.permute.xlu0 %1691
          %s1694 = sor.u32 256, 64
          %1695 = vbcast.lane.b32.xlu0 %v1219, %s1694
          %v1696 = vpop.permute.xlu0 %1695
          %s1698 = sor.u32 256, 72
          %1699 = vbcast.lane.b32.xlu0 %v1219, %s1698
          %v1700 = vpop.permute.xlu0 %1699
          %s1702 = sor.u32 256, 80
          %1703 = vbcast.lane.b32.xlu0 %v1219, %s1702
          %v1704 = vpop.permute.xlu0 %1703
          %s1706 = sor.u32 256, 88
          %1707 = vbcast.lane.b32.xlu0 %v1219, %s1706
          %v1708 = vpop.permute.xlu0 %1707
          %s1710 = sor.u32 256, 64
          %1711 = vbcast.lane.b32.xlu0 %v1239, %s1710
          %v1712 = vpop.permute.xlu0 %1711
          %s1714 = sor.u32 256, 72
          %1715 = vbcast.lane.b32.xlu0 %v1239, %s1714
          %v1716 = vpop.permute.xlu0 %1715
          %s1718 = sor.u32 256, 80
          %1719 = vbcast.lane.b32.xlu0 %v1239, %s1718
          %v1720 = vpop.permute.xlu0 %1719
          %s1722 = sor.u32 256, 88
          %1723 = vbcast.lane.b32.xlu0 %v1239, %s1722
          %v1724 = vpop.permute.xlu0 %1723
          %s1726 = sor.u32 256, 64
          %1727 = vbcast.lane.b32.xlu0 %v1259, %s1726
          %v1728 = vpop.permute.xlu0 %1727
          %s1730 = sor.u32 256, 72
          %1731 = vbcast.lane.b32.xlu0 %v1259, %s1730
          %v1732 = vpop.permute.xlu0 %1731
          %s1734 = sor.u32 256, 80
          %1735 = vbcast.lane.b32.xlu0 %v1259, %s1734
          %v1736 = vpop.permute.xlu0 %1735
          %s1738 = sor.u32 256, 88
          %1739 = vbcast.lane.b32.xlu0 %v1259, %s1738
          %v1740 = vpop.permute.xlu0 %1739
          %s1742 = sor.u32 256, 64
          %1743 = vbcast.lane.b32.xlu0 %v1279, %s1742
          %v1744 = vpop.permute.xlu0 %1743
          %s1746 = sor.u32 256, 72
          %1747 = vbcast.lane.b32.xlu0 %v1279, %s1746
          %v1748 = vpop.permute.xlu0 %1747
          %s1750 = sor.u32 256, 80
          %1751 = vbcast.lane.b32.xlu0 %v1279, %s1750
          %v1752 = vpop.permute.xlu0 %1751
          %s1754 = sor.u32 256, 88
          %1755 = vbcast.lane.b32.xlu0 %v1279, %s1754
          %v1756 = vpop.permute.xlu0 %1755
          %s1758 = sor.u32 256, 64
          %1759 = vbcast.lane.b32.xlu0 %v1299, %s1758
          %v1760 = vpop.permute.xlu0 %1759
          %s1762 = sor.u32 256, 72
          %1763 = vbcast.lane.b32.xlu0 %v1299, %s1762
          %v1764 = vpop.permute.xlu0 %1763
          %s1766 = sor.u32 256, 80
          %1767 = vbcast.lane.b32.xlu0 %v1299, %s1766
          %v1768 = vpop.permute.xlu0 %1767
          %s1770 = sor.u32 256, 88
          %1771 = vbcast.lane.b32.xlu0 %v1299, %s1770
          %v1772 = vpop.permute.xlu0 %1771
          %v1773 = vld [vmem:[#allocation7] sm:$0xff]
          %v1774 = vld [vmem:[#allocation7 + $0x8] sm:$0xff]
          %v1775 = vld [vmem:[#allocation7 + $0x10] sm:$0xff]
          %v1776 = vld [vmem:[#allocation7 + $0x18] sm:$0xff]
          %v1777 = vld [vmem:[#allocation7 + $0x20] sm:$0xff]
          %v1778 = vld [vmem:[#allocation7 + $0x28] sm:$0xff]
          %v1779 = vld [vmem:[#allocation7 + $0x30] sm:$0xff]
          %v1780 = vld [vmem:[#allocation7 + $0x38] sm:$0xff]
          %v1781 = vld [vmem:[#allocation7 + $0x40] sm:$0xff]
          %v1782 = vld [vmem:[#allocation7 + $0x48] sm:$0xff]
          %v1783 = vld [vmem:[#allocation7 + $0x50] sm:$0xff]
          %v1784 = vld [vmem:[#allocation7 + $0x58] sm:$0xff]
          %v1785 = vld [vmem:[#allocation7 + $0x60] sm:$0xff]
          %v1786 = vld [vmem:[#allocation7 + $0x68] sm:$0xff]
          %v1787 = vld [vmem:[#allocation7 + $0x70] sm:$0xff]
          %v1788 = vld [vmem:[#allocation7 + $0x78] sm:$0xff]
          %v1789 = vld [vmem:[#allocation7 + $0x80] sm:$0xff]
          %v1790 = vld [vmem:[#allocation7 + $0x88] sm:$0xff]
          %v1791 = vld [vmem:[#allocation7 + $0x90] sm:$0xff]
          %v1792 = vld [vmem:[#allocation7 + $0x98] sm:$0xff]
          %v1793 = vld [vmem:[#allocation7 + $0xa0] sm:$0xff]
          %v1794 = vld [vmem:[#allocation7 + $0xa8] sm:$0xff]
          %v1795 = vld [vmem:[#allocation7 + $0xb0] sm:$0xff]
          %v1796 = vld [vmem:[#allocation7 + $0xb8] sm:$0xff]
          %v1797 = vld [vmem:[#allocation7 + $0xc0] sm:$0xff]
          %v1798 = vld [vmem:[#allocation7 + $0xc8] sm:$0xff]
          %v1799 = vld [vmem:[#allocation7 + $0xd0] sm:$0xff]
          %v1800 = vld [vmem:[#allocation7 + $0xd8] sm:$0xff]
          %v1801 = vld [vmem:[#allocation7 + $0xe0] sm:$0xff]
          %v1802 = vld [vmem:[#allocation7 + $0xe8] sm:$0xff]
          %v1803 = vld [vmem:[#allocation7 + $0xf0] sm:$0xff]
          %v1804 = vld [vmem:[#allocation7 + $0xf8] sm:$0xff]
          %v1805 = vmul.f32 %v1648, %v1773
          %v1806 = vmul.f32 %v1652, %v1774
          %v1807 = vmul.f32 %v1656, %v1775
          %v1808 = vmul.f32 %v1660, %v1776
          %v1809 = vmul.f32 %v1664, %v1777
          %v1810 = vmul.f32 %v1668, %v1778
          %v1811 = vmul.f32 %v1672, %v1779
          %v1812 = vmul.f32 %v1676, %v1780
          %v1813 = vmul.f32 %v1680, %v1781
          %v1814 = vmul.f32 %v1684, %v1782
          %v1815 = vmul.f32 %v1688, %v1783
          %v1816 = vmul.f32 %v1692, %v1784
          %v1817 = vmul.f32 %v1696, %v1785
          %v1818 = vmul.f32 %v1700, %v1786
          %v1819 = vmul.f32 %v1704, %v1787
          %v1820 = vmul.f32 %v1708, %v1788
          %v1821 = vmul.f32 %v1712, %v1789
          %v1822 = vmul.f32 %v1716, %v1790
          %v1823 = vmul.f32 %v1720, %v1791
          %v1824 = vmul.f32 %v1724, %v1792
          %v1825 = vmul.f32 %v1728, %v1793
          %v1826 = vmul.f32 %v1732, %v1794
          %v1827 = vmul.f32 %v1736, %v1795
          %v1828 = vmul.f32 %v1740, %v1796
          %v1829 = vmul.f32 %v1744, %v1797
          %v1830 = vmul.f32 %v1748, %v1798
          %v1831 = vmul.f32 %v1752, %v1799
          %v1832 = vmul.f32 %v1756, %v1800
          %v1833 = vmul.f32 %v1760, %v1801
          %v1834 = vmul.f32 %v1764, %v1802
          %v1835 = vmul.f32 %v1768, %v1803
          %v1836 = vmul.f32 %v1772, %v1804
          %v1837 = vsel %vm811, %v1805, 0.0
          %v1838 = vsel %vm811, %v1806, 0.0
          %v1839 = vadd.f32 %v1837, %v1838
          %v1840 = vsel %vm811, %v1807, 0.0
          %v1841 = vadd.f32 %v1839, %v1840
          %v1842 = vsel %vm811, %v1808, 0.0
          %v1843 = vadd.f32 %v1841, %v1842
          %v1844 = vrot.slane %v1843, 4
          %v1845 = vadd.f32 %v1843, %v1844
          %v1846 = vrot.slane %v1845, 2
          %v1847 = vadd.f32 %v1845, %v1846
          %v1848 = vrot.slane %v1847, 1
          %v1849 = vadd.f32 %v1847, %v1848
          %v1850 = vsel %vm811, %v1809, 0.0
          %v1851 = vsel %vm811, %v1810, 0.0
          %v1852 = vadd.f32 %v1850, %v1851
          %v1853 = vsel %vm811, %v1811, 0.0
          %v1854 = vadd.f32 %v1852, %v1853
          %v1855 = vsel %vm811, %v1812, 0.0
          %v1856 = vadd.f32 %v1854, %v1855
          %v1857 = vrot.slane %v1856, 4
          %v1858 = vadd.f32 %v1856, %v1857
          %v1859 = vrot.slane %v1858, 2
          %v1860 = vadd.f32 %v1858, %v1859
          %v1861 = vrot.slane %v1860, 1
          %v1862 = vadd.f32 %v1860, %v1861
          %v1863 = vsel %vm811, %v1813, 0.0
          %v1864 = vsel %vm811, %v1814, 0.0
          %v1865 = vadd.f32 %v1863, %v1864
          %v1866 = vsel %vm811, %v1815, 0.0
          %v1867 = vadd.f32 %v1865, %v1866
          %v1868 = vsel %vm811, %v1816, 0.0
          %v1869 = vadd.f32 %v1867, %v1868
          %v1870 = vrot.slane %v1869, 4
          %v1871 = vadd.f32 %v1869, %v1870
          %v1872 = vrot.slane %v1871, 2
          %v1873 = vadd.f32 %v1871, %v1872
          %v1874 = vrot.slane %v1873, 1
          %v1875 = vadd.f32 %v1873, %v1874
          %v1876 = vsel %vm811, %v1817, 0.0
          %v1877 = vsel %vm811, %v1818, 0.0
          %v1878 = vadd.f32 %v1876, %v1877
          %v1879 = vsel %vm811, %v1819, 0.0
          %v1880 = vadd.f32 %v1878, %v1879
          %v1881 = vsel %vm811, %v1820, 0.0
          %v1882 = vadd.f32 %v1880, %v1881
          %v1883 = vrot.slane %v1882, 4
          %v1884 = vadd.f32 %v1882, %v1883
          %v1885 = vrot.slane %v1884, 2
          %v1886 = vadd.f32 %v1884, %v1885
          %v1887 = vrot.slane %v1886, 1
          %v1888 = vadd.f32 %v1886, %v1887
          %v1889 = vsel %vm811, %v1821, 0.0
          %v1890 = vsel %vm811, %v1822, 0.0
          %v1891 = vadd.f32 %v1889, %v1890
          %v1892 = vsel %vm811, %v1823, 0.0
          %v1893 = vadd.f32 %v1891, %v1892
          %v1894 = vsel %vm811, %v1824, 0.0
          %v1895 = vadd.f32 %v1893, %v1894
          %v1896 = vrot.slane %v1895, 4
          %v1897 = vadd.f32 %v1895, %v1896
          %v1898 = vrot.slane %v1897, 2
          %v1899 = vadd.f32 %v1897, %v1898
          %v1900 = vrot.slane %v1899, 1
          %v1901 = vadd.f32 %v1899, %v1900
          %v1902 = vsel %vm811, %v1825, 0.0
          %v1903 = vsel %vm811, %v1826, 0.0
          %v1904 = vadd.f32 %v1902, %v1903
          %v1905 = vsel %vm811, %v1827, 0.0
          %v1906 = vadd.f32 %v1904, %v1905
          %v1907 = vsel %vm811, %v1828, 0.0
          %v1908 = vadd.f32 %v1906, %v1907
          %v1909 = vrot.slane %v1908, 4
          %v1910 = vadd.f32 %v1908, %v1909
          %v1911 = vrot.slane %v1910, 2
          %v1912 = vadd.f32 %v1910, %v1911
          %v1913 = vrot.slane %v1912, 1
          %v1914 = vadd.f32 %v1912, %v1913
          %v1915 = vsel %vm811, %v1829, 0.0
          %v1916 = vsel %vm811, %v1830, 0.0
          %v1917 = vadd.f32 %v1915, %v1916
          %v1918 = vsel %vm811, %v1831, 0.0
          %v1919 = vadd.f32 %v1917, %v1918
          %v1920 = vsel %vm811, %v1832, 0.0
          %v1921 = vadd.f32 %v1919, %v1920
          %v1922 = vrot.slane %v1921, 4
          %v1923 = vadd.f32 %v1921, %v1922
          %v1924 = vrot.slane %v1923, 2
          %v1925 = vadd.f32 %v1923, %v1924
          %v1926 = vrot.slane %v1925, 1
          %v1927 = vadd.f32 %v1925, %v1926
          %v1928 = vsel %vm811, %v1833, 0.0
          %v1929 = vsel %vm811, %v1834, 0.0
          %v1930 = vadd.f32 %v1928, %v1929
          %v1931 = vsel %vm811, %v1835, 0.0
          %v1932 = vadd.f32 %v1930, %v1931
          %v1933 = vsel %vm811, %v1836, 0.0
          %v1934 = vadd.f32 %v1932, %v1933
          %v1935 = vrot.slane %v1934, 4
          %v1936 = vadd.f32 %v1934, %v1935
          %v1937 = vrot.slane %v1936, 2
          %v1938 = vadd.f32 %v1936, %v1937
          %v1939 = vrot.slane %v1938, 1
          %v1940 = vadd.f32 %v1938, %v1939
          %vm1949 = vcmask 1041409
          %v1950 = vsel %vm1949, %v1862, %v1849
          %vm1951 = vcmask 1042434
          %v1952 = vsel %vm1951, %v1875, %v1950
          %vm1953 = vcmask 1043459
          %v1954 = vsel %vm1953, %v1888, %v1952
          %vm1955 = vcmask 1044484
          %v1956 = vsel %vm1955, %v1901, %v1954
          %vm1957 = vcmask 1045509
          %v1958 = vsel %vm1957, %v1914, %v1956
          %vm1959 = vcmask 1046534
          %v1960 = vsel %vm1959, %v1927, %v1958
          %vm1961 = vcmask 1047559
          %v1962 = vsel %vm1961, %v1940, %v1960
          %s1964 = scalar_lea.vmem [#allocation5], %s912
          %1965 = vst.msk [vmem:[%s1964] sm:$0xff] %vm811, %v1962
        $region93: #{tpu_custom_call.1} parent=63 // loop_footer
          %s911 = sadd.s32 1, %s907
        $region94: #{tpu_custom_call.1} parent=63 // loop_footer_branch
          %906 = sbr.rel target = $region90
        $region95: #{tpu_custom_call.1} parent=63 // loop_exit
          _
        %v1966 = vld [vmem:[#allocation5] sm:$0xff]
        %v1967 = vld [vmem:[#allocation5 + $0x8] sm:$0xff]
        %v1968 = vld [vmem:[%s523] sm:$0x1]
        %v1970 = vlaneseq
        %v1971 = vshrl.u32 %v1970, 7
        %v1972 = vsub.s32 0, %v1971
        %v1973 = vrot.slane %v1968, %v1972
        %v1975 = vmul.f32 %v809, %v1973
        %v1976 = vmul.f32 %v810, %v1973
        %v1977 = vadd.f32 %v1966, %v1975
        %v1978 = vadd.f32 %v1967, %v1976
        %v1979 = vsub.f32 0.0, %v695
        %v1980 = vsub.f32 0.0, %v700
        %v1981 = vmul.f32 %v1979, 1.442695
        %v1982 = vpow.pop %v1981
        %v1983 = vmul.f32 %v1980, 1.442695
        %v1984 = vpow.pop %v1983
        %v1985 = vadd.f32 %v1982, 1.0
        %v1986 = vadd.f32 %v1984, 1.0
        %v1987 = vrcp.pop %v1985
        %v1988 = vrcp.pop %v1986
        %v1989 = vmul.f32 %v695, %v1987
        %v1990 = vmul.f32 %v700, %v1988
        %1993 = vrot.lane.b32.xlu0 %v1989, 96
        %v1994 = vpop.permute.xlu0 %1993
        %1995 = vrot.lane.b32.xlu0 %v1990, 96
        %v1996 = vpop.permute.xlu0 %1995
        %v1999 = vmul.f32 %v1977, %v1994
        %v2000 = vmul.f32 %v1978, %v1996
        %p2001 = scmp.lt.s32.totalorder %s35, 1
        // Predicated region
        $region96: #{tpu_custom_call.1} parent=63 // pred_check
          %p2002 = pneg %p2001
        $region97: #{tpu_custom_call.1} parent=63 // pred_check_branch
          %2004 = sbr.rel (%p2002) target = $region99
        $region98: #{tpu_custom_call.1} parent=63 // pred_region
          %v2005 = vld [vmem:[%s606] sm:$0xff]
          %v2006 = vld [vmem:[%s606 + $0x8] sm:$0xff]
          %v2007 = vld [vmem:[%s606 + $0x10] sm:$0xff]
          %v2008 = vld [vmem:[%s606 + $0x18] sm:$0xff]
          %v2010 = vsel %vm811, %v1999, 0
          %v2013 = vsel %vm811, %v2000, 0
          %2015 = vmatprep.subr.mxu0 0.0
          %2016 = vmatpush1.msra.mxu0 %v2005
          %2017 = vmatprep.subr.mxu0 0.0
          %2018 = vmatpush1.msra.mxu0 %v2006
          %2019 = vmatprep.subr.mxu0 0.0
          %2020 = vmatpush1.msra.mxu0 %v2007
          %2021 = vmatprep.subr.mxu0 0.0
          %2022 = vmatpush1.msra.mxu0 %v2008
          %2023 = vmatprep.subr.mxu0 0.0
          %2024 = vmatpush1.msra.mxu0 0.0
          %2025 = vmatprep.subr.mxu0 0.0
          %2026 = vmatpush1.msra.mxu0 0.0
          %2027 = vmatprep.subr.mxu0 0.0
          %2028 = vmatpush1.msra.mxu0 0.0
          %2029 = vmatprep.subr.mxu0 0.0
          %2030 = vmatpush1.msra.mxu0 0.0
          %2031 = vmatprep.subr.mxu0 0.0
          %2032 = vmatpush1.msra.mxu0 0.0
          %2033 = vmatprep.subr.mxu0 0.0
          %2034 = vmatpush1.msra.mxu0 0.0
          %2035 = vmatprep.subr.mxu0 0.0
          %2036 = vmatpush1.msra.mxu0 0.0
          %2037 = vmatprep.subr.mxu0 0.0
          %2038 = vmatpush1.msra.mxu0 0.0
          %2039 = vmatprep.subr.mxu0 0.0
          %2040 = vmatpush1.msra.mxu0 0.0
          %2041 = vmatprep.subr.mxu0 0.0
          %2042 = vmatpush1.msra.mxu0 0.0
          %2043 = vmatprep.subr.mxu0 0.0
          %2044 = vmatpush1.msra.mxu0 0.0
          %2045 = vmatprep.subr.mxu0 0.0
          %2046 = vmatpush1.msra.mxu0 0.0
          %2047 = vmatprep.subr.mxu0 0.0
          %2048 = vmatpush1.msra.mxu0 0.0
          %2049 = vmatprep.subr.mxu0 0.0
          %2050 = vmatpush1.msra.mxu0 0.0
          %2051 = vmatprep.subr.mxu0 0.0
          %2052 = vmatpush1.msra.mxu0 0.0
          %2053 = vmatprep.subr.mxu0 0.0
          %2054 = vmatpush1.msra.mxu0 0.0
          %2055 = vmatprep.subr.mxu0 0.0
          %2056 = vmatpush1.msra.mxu0 0.0
          %2057 = vmatprep.subr.mxu0 0.0
          %2058 = vmatpush1.msra.mxu0 0.0
          %2059 = vmatprep.subr.mxu0 0.0
          %2060 = vmatpush1.msra.mxu0 0.0
          %2061 = vmatprep.subr.mxu0 0.0
          %2062 = vmatpush1.msra.mxu0 0.0
          %2063 = vmatprep.subr.mxu0 0.0
          %2064 = vmatpush1.msra.mxu0 0.0
          %2065 = vmatprep.subr.mxu0 0.0
          %2066 = vmatpush1.msra.mxu0 0.0
          %2067 = vmatprep.subr.mxu0 0.0
          %2068 = vmatpush1.msra.mxu0 0.0
          %2069 = vmatprep.subr.mxu0 0.0
          %2070 = vmatpush1.msra.mxu0 0.0
          %2071 = vmatprep.subr.mxu0 0.0
          %2072 = vmatpush1.msra.mxu0 0.0
          %2073 = vmatprep.subr.mxu0 0.0
          %2074 = vmatpush1.msra.mxu0 0.0
          %2075 = vmatprep.subr.mxu0 0.0
          %2076 = vmatpush1.msra.mxu0 0.0
          %2077 = vmatprep.subr.mxu0 0.0
          %2078 = vmatpush1.msra.mxu0 0.0
          %2079 = vmatprep.mubr.f32.mxu0 0.0
          %2080 = vmatmul.mubr.f32.gmra.mrb[0].mxu0 %v2010
          %v2081 = vpop.f32.mrb[0].mxu0
          %v2082 = vadd.f32 0.0, %v2081
          %v2083 = vpop.f32.mrb[0].mxu0
          %2084 = vmatprep.mubr.f32.mxu0 0.0
          %2085 = vmatmul.mubr.f32.gmra.mrb[0].mxu0 %v2013
          %v2086 = vpop.f32.mrb[0].mxu0
          %v2087 = vadd.f32 0.0, %v2086
          %v2088 = vpop.f32.mrb[0].mxu0
          %2089 = vdwg.mxu0
          %2090 = vst.msk [vmem:[#allocation2] sm:$0xff] %vm621, %v2082
          %2091 = vst.msk [vmem:[#allocation2 + $0x8] sm:$0xff] %vm621, %v2087
        $region99: #{tpu_custom_call.1} parent=63 // pred_fallthru
          _
        %p2092 = scmp.eq.s32.totalorder %s35, 1
        // Predicated region
        $region100: #{tpu_custom_call.1} parent=63 // pred_check
          %p2093 = pneg %p2092
        $region101: #{tpu_custom_call.1} parent=63 // pred_check_branch
          %2095 = sbr.rel (%p2093) target = $region103
        $region102: #{tpu_custom_call.1} parent=63 // pred_region
          %v2096 = vld [vmem:[%s9] sm:$0xff]
          %v2097 = vld [vmem:[%s9 + $0x8] sm:$0xff]
          %v2098 = vld [vmem:[%s9 + $0x10] sm:$0xff]
          %v2099 = vld [vmem:[%s9 + $0x18] sm:$0xff]
          %v2100 = vld [vmem:[%s10] sm:$0x1]
          %v2102 = vlaneseq
          %v2103 = vshrl.u32 %v2102, 7
          %v2104 = vsub.s32 0, %v2103
          %v2105 = vrot.slane %v2100, %v2104
          %v2108 = vsel %vm811, %v1999, 0
          %v2111 = vsel %vm811, %v2000, 0
          %2113 = vmatprep.subr.mxu0 0.0
          %2114 = vmatpush1.msra.mxu0 %v2096
          %2115 = vmatprep.subr.mxu0 0.0
          %2116 = vmatpush1.msra.mxu0 %v2097
          %2117 = vmatprep.subr.mxu0 0.0
          %2118 = vmatpush1.msra.mxu0 %v2098
          %2119 = vmatprep.subr.mxu0 0.0
          %2120 = vmatpush1.msra.mxu0 %v2099
          %2121 = vmatprep.subr.mxu0 0.0
          %2122 = vmatpush1.msra.mxu0 0.0
          %2123 = vmatprep.subr.mxu0 0.0
          %2124 = vmatpush1.msra.mxu0 0.0
          %2125 = vmatprep.subr.mxu0 0.0
          %2126 = vmatpush1.msra.mxu0 0.0
          %2127 = vmatprep.subr.mxu0 0.0
          %2128 = vmatpush1.msra.mxu0 0.0
          %2129 = vmatprep.subr.mxu0 0.0
          %2130 = vmatpush1.msra.mxu0 0.0
          %2131 = vmatprep.subr.mxu0 0.0
          %2132 = vmatpush1.msra.mxu0 0.0
          %2133 = vmatprep.subr.mxu0 0.0
          %2134 = vmatpush1.msra.mxu0 0.0
          %2135 = vmatprep.subr.mxu0 0.0
          %2136 = vmatpush1.msra.mxu0 0.0
          %2137 = vmatprep.subr.mxu0 0.0
          %2138 = vmatpush1.msra.mxu0 0.0
          %2139 = vmatprep.subr.mxu0 0.0
          %2140 = vmatpush1.msra.mxu0 0.0
          %2141 = vmatprep.subr.mxu0 0.0
          %2142 = vmatpush1.msra.mxu0 0.0
          %2143 = vmatprep.subr.mxu0 0.0
          %2144 = vmatpush1.msra.mxu0 0.0
          %2145 = vmatprep.subr.mxu0 0.0
          %2146 = vmatpush1.msra.mxu0 0.0
          %2147 = vmatprep.subr.mxu0 0.0
          %2148 = vmatpush1.msra.mxu0 0.0
          %2149 = vmatprep.subr.mxu0 0.0
          %2150 = vmatpush1.msra.mxu0 0.0
          %2151 = vmatprep.subr.mxu0 0.0
          %2152 = vmatpush1.msra.mxu0 0.0
          %2153 = vmatprep.subr.mxu0 0.0
          %2154 = vmatpush1.msra.mxu0 0.0
          %2155 = vmatprep.subr.mxu0 0.0
          %2156 = vmatpush1.msra.mxu0 0.0
          %2157 = vmatprep.subr.mxu0 0.0
          %2158 = vmatpush1.msra.mxu0 0.0
          %2159 = vmatprep.subr.mxu0 0.0
          %2160 = vmatpush1.msra.mxu0 0.0
          %2161 = vmatprep.subr.mxu0 0.0
          %2162 = vmatpush1.msra.mxu0 0.0
          %2163 = vmatprep.subr.mxu0 0.0
          %2164 = vmatpush1.msra.mxu0 0.0
          %2165 = vmatprep.subr.mxu0 0.0
          %2166 = vmatpush1.msra.mxu0 0.0
          %2167 = vmatprep.subr.mxu0 0.0
          %2168 = vmatpush1.msra.mxu0 0.0
          %2169 = vmatprep.subr.mxu0 0.0
          %2170 = vmatpush1.msra.mxu0 0.0
          %2171 = vmatprep.subr.mxu0 0.0
          %2172 = vmatpush1.msra.mxu0 0.0
          %2173 = vmatprep.subr.mxu0 0.0
          %2174 = vmatpush1.msra.mxu0 0.0
          %2175 = vmatprep.subr.mxu0 0.0
          %2176 = vmatpush1.msra.mxu0 0.0
          %2177 = vmatprep.mubr.f32.mxu0 0.0
          %2178 = vmatmul.mubr.f32.gmra.mrb[0].mxu0 %v2108
          %v2179 = vpop.f32.mrb[0].mxu0
          %v2180 = vadd.f32 %v2105, %v2179
          %v2181 = vpop.f32.mrb[0].mxu0
          %2182 = vmatprep.mubr.f32.mxu0 0.0
          %2183 = vmatmul.mubr.f32.gmra.mrb[0].mxu0 %v2111
          %v2184 = vpop.f32.mrb[0].mxu0
          %v2185 = vadd.f32 %v2105, %v2184
          %v2186 = vpop.f32.mrb[0].mxu0
          %2187 = vdwg.mxu0
          %2188 = vst [vmem:[#allocation17] sm:$0xff] %v2180
          %2189 = vst [vmem:[#allocation17 + $0x8] sm:$0xff] %v2185
        $region103: #{tpu_custom_call.1} parent=63 // pred_fallthru
          _
        // Predicated region
        $region104: #{tpu_custom_call.1} parent=63 // pred_check
          %p2190 = pneg %p336
        $region105: #{tpu_custom_call.1} parent=63 // pred_check_branch
          %2192 = sbr.rel (%p2190) target = $region107
        $region106: #{tpu_custom_call.1} parent=63 // pred_region
          %s2193 = smul.u32 2, %s34
          %s2195 = ssub.s32 256, 256
          %2196 = vsyncadd [#allocation10], %s2195
          %s2197 = smul.addr %s2193, 128
          %s2198 = scalar_lea.hbm %s11, %s2197
          %s2199 = sshll.u32 [#allocation17], 4
          %s2200 = int_to_ptr.vmem [resolvable:$true] %s2199
          %2205 = dma.vmem_to_hbm [thread:$0]  %s2200, 256, %s2198, [#allocation10], 128, 128, 8
        $region107: #{tpu_custom_call.1} parent=63 // pred_fallthru
          _
        // Predicated region
        $region108: #{tpu_custom_call.1} parent=63 // pred_check
          %p2206 = pneg %p336
        $region109: #{tpu_custom_call.1} parent=63 // pred_check_branch
          %2208 = sbr.rel (%p2206) target = $region111
        $region110: #{tpu_custom_call.1} parent=63 // pred_region
          %2209 = dma.done [#allocation10], 256
        $region111: #{tpu_custom_call.1} parent=63 // pred_fallthru
          _
      $region64: #{tpu_custom_call.1} parent=5 // pred_fallthru
        _
      %p2210 = scmp.le.s32.totalorder 2, %s25
      // Predicated region
      $region112: #{tpu_custom_call.1} parent=5 // pred_check
        %p2211 = pneg %p2210
      $region113: #{tpu_custom_call.1} parent=5 // pred_check_branch
        %2213 = sbr.rel (%p2211) target = $region115
      $region114: #{tpu_custom_call.1} parent=5 // pred_region
        %s2214 = ssub.s32 %s25, 2
      $region115: #{tpu_custom_call.1} parent=5 // pred_fallthru
        _
    $region6: #{tpu_custom_call.1} parent=1 // loop_footer
      %s29 = sadd.s32 1, %s25
    $region7: #{tpu_custom_call.1} parent=1 // loop_footer_branch
      %24 = sbr.rel target = $region3
    $region8: #{tpu_custom_call.1} parent=1 // loop_exit
      _
    %2215 = vsyncpa [#allocation9], 1
    %s2216 = scalar_lea.sflag [#allocation9], 1
    %2217 = vsyncpa %s2216, 1
    %2218 = vsyncpa [#allocation12], 1
    %s2219 = scalar_lea.sflag [#allocation12], 1
    %2220 = vsyncpa %s2219, 1
    %2221 = vsyncpa [#allocation15], 1
    %s2222 = scalar_lea.sflag [#allocation15], 1
    %2223 = vsyncpa %s2222, 1
    %2224 = vsyncpa [#allocation10], 1
    %s2225 = scalar_lea.sflag [#allocation10], 1
    %2226 = vsyncpa %s2225, 1

</llo_original>
